<compile_context>
chip_gen: v6e
topology: v6e:2x2x1
jax: 0.10.0
libtpu: 0.0.40
codegen_flags: <defaults>
</compile_context>

<pallas_src>
import functools

import jax
import jax.numpy as jnp
from jax.experimental import pallas as pl
from jax.experimental.pallas import tpu as pltpu

SUBLANE = 8
LANE = 128


def _round_up(n, m):
    return ((n + m - 1) // m) * m


# ----------------------------------------------------------------------------
# Fused forward kernel
#   quantum layer:  q = | x @ (cos(theta_eff) + 1j*sin(phi_eff)) |
#   stacked LSTM (PyTorch gate order i, f, g, o), zero initial state, wavefront
#   head:           fc1 -> ReLU -> (dropout = identity in eval) -> fc2 (padded)
# ----------------------------------------------------------------------------
def fused_forward_kernel(
    x_ref,       # (T*Bp, I)     time-major flattened, batch padded to Bp
    theta_ref,   # (I, H)        theta + per-forward noise
    phi_ref,     # (I, H)        phi   + per-forward noise
    w_ih0_ref,   # (H, 4H)       layer-0 input->gates (transposed)
    w_hh0_ref,   # (H, 4H)       layer-0 hidden->gates (transposed)
    b0_ref,      # (1, 4H)       layer-0 combined bias
    w_cat_ref,   # (max(L-1,1), 2H, 4H)  layers>=1: stacked [W_ih ; W_hh]
    b_hi_ref,    # (max(L-1,1), 1, 4H)   layers>=1: combined bias
    w1_ref,      # (H, H)
    b1_ref,      # (1, H)
    w2_ref,      # (H, Op)       fc2 zero-padded to lane-dense Op
    b2_ref,      # (1, Op)
    o_ref,       # (Bp, Op)      output (lane-dense store)
    *, seq_len, batch_padded, hidden, num_layers,
):
    f32 = jnp.float32
    T, Bp, H = seq_len, batch_padded, hidden

    # ---- QuantumInspiredLayer over all (t, b) at once (off the recurrence path) ----
    x = x_ref[...]                                                    # (T*Bp, I)
    re = jnp.dot(x, jnp.cos(theta_ref[...]), preferred_element_type=f32)
    im = jnp.dot(x, jnp.sin(phi_ref[...]), preferred_element_type=f32)
    seq = jnp.sqrt(re * re + im * im)                                 # (T*Bp, H)

    # ---- Layer-0 input projection hoisted out of the recurrence ----
    gx0 = jnp.dot(seq, w_ih0_ref[...], preferred_element_type=f32) + b0_ref[...]  # (T*Bp, 4H)

    # Hoist all weight reads out of the wavefront loop.
    w_hh0 = w_hh0_ref[...]
    w_cat = [w_cat_ref[l] for l in range(num_layers - 1)]             # (2H, 4H) each
    b_hi = [b_hi_ref[l] for l in range(num_layers - 1)]               # (1, 4H) each

    zeros = jnp.zeros((Bp, H), f32)
    h = [zeros] * num_layers
    c = [zeros] * num_layers

    def lstm_cell(g, c_prev):
        # 4H == 128 == one lane width: one sigmoid + one tanh over the whole vreg,
        # then static lane slices for the gate combine.
        sig = jax.nn.sigmoid(g)
        tnh = jnp.tanh(g)
        i_g = sig[:, 0 * H:1 * H]
        f_g = sig[:, 1 * H:2 * H]
        g_g = tnh[:, 2 * H:3 * H]
        o_g = sig[:, 3 * H:4 * H]
        c_new = f_g * c_prev + i_g * g_g
        h_new = o_g * jnp.tanh(c_new)
        return h_new, c_new

    # ---- Wavefront over (layer, time): step s runs layer l at time t = s - l ----
    # Critical path: T + L - 1 dependent cell updates instead of L*T; within a
    # wavefront step the layers are independent streams for the MXU/EUP.
    # TODO(synk): W_hh could additionally be held weight-stationary on the MXU
    # (pltpu.matmul_push_rhs / matmul_acc_lhs / matmul_pop) across the wavefront.
    for s in range(T + num_layers - 1):
        prev_h = list(h)   # snapshot: layer l reads layer l-1's output of step s-1
        for l in range(num_layers):
            t = s - l
            if not (0 <= t < T):
                continue
            if l == 0:
                # Static slice start t*Bp is a multiple of 8 -> sublane aligned.
                g = gx0[t * Bp:(t + 1) * Bp, :] + jnp.dot(
                    prev_h[0], w_hh0, preferred_element_type=f32)     # (Bp, 4H)
            else:
                # Fused per-step matmul: [x_t ; h_{t-1}] @ [W_ih ; W_hh]
                xh = jnp.concatenate([prev_h[l - 1], prev_h[l]], axis=-1)  # (Bp, 2H)
                g = jnp.dot(xh, w_cat[l - 1], preferred_element_type=f32) + b_hi[l - 1]
            h[l], c[l] = lstm_cell(g, c[l])

    # ---- FC head on the last layer's final hidden state (== out[:, -1, :]) ----
    z = jnp.dot(h[num_layers - 1], w1_ref[...], preferred_element_type=f32) + b1_ref[...]
    z = jnp.maximum(z, 0.0)
    # TODO(synk): nn.Dropout(0.2) is identity at inference; training-mode dropout
    # is not implemented.
    o_ref[...] = jnp.dot(z, w2_ref[...], preferred_element_type=f32) + b2_ref[...]


# ----------------------------------------------------------------------------
# Wrapper
# ----------------------------------------------------------------------------
@jax.jit
def enhanced_quantum_lstm_forward(x, params, noise_key):
    """x: (B, T, input_size) float32 -> (B, output_size) float32."""
    B, T, I = x.shape
    H = params["theta"].shape[1]
    L = params["w_ih_t"].shape[0]
    O = params["w2_t"].shape[1]

    Bp = _round_up(B, SUBLANE)      # fill sublanes (B=2 -> 8)
    Op = _round_up(O, LANE)         # lane-dense final store (O=1 -> 128)

    # Per-forward Gaussian noise on theta/phi (torch.randn_like * 0.01 equivalent).
    k1, k2 = jax.random.split(noise_key)
    theta_eff = params["theta"] + 0.01 * jax.random.normal(k1, params["theta"].shape, jnp.float32)
    phi_eff = params["phi"] + 0.01 * jax.random.normal(k2, params["phi"].shape, jnp.float32)

    # Pad batch to a full sublane tile; padded rows are zero and sliced off below.
    x_p = jnp.zeros((Bp, T, I), jnp.float32).at[:B].set(x)
    # Time-major flattened input so the kernel never transposes internally.
    x_tm = jnp.transpose(x_p, (1, 0, 2)).reshape(T * Bp, I)           # (T*Bp, I)

    # Layer-0 weights; layers >= 1 get stacked [W_ih ; W_hh] for the fused matmul.
    w_ih0 = params["w_ih_t"][0]
    w_hh0 = params["w_hh_t"][0]
    b0 = params["b"][0]
    if L > 1:
        w_cat = jnp.concatenate([params["w_ih_t"][1:], params["w_hh_t"][1:]], axis=1)  # (L-1,2H,4H)
        b_hi = params["b"][1:]                                                          # (L-1,1,4H)
    else:
        w_cat = jnp.zeros((1, 2 * H, 4 * H), jnp.float32)   # dummy, never read
        b_hi = jnp.zeros((1, 1, 4 * H), jnp.float32)

    # Zero-pad fc2 to Op output lanes so the final store is an unmasked full vreg.
    w2_p = jnp.zeros((H, Op), jnp.float32).at[:, :O].set(params["w2_t"])
    b2_p = jnp.zeros((1, Op), jnp.float32).at[:, :O].set(params["b2"])

    kernel = functools.partial(
        fused_forward_kernel, seq_len=T, batch_padded=Bp, hidden=H, num_layers=L)
    vmem = pl.BlockSpec(memory_space=pltpu.MemorySpace.VMEM)          # whole array in VMEM

    out = pl.pallas_call(
        kernel,
        out_shape=jax.ShapeDtypeStruct((Bp, Op), jnp.float32),
        in_specs=[vmem] * 12,
        out_specs=vmem,
    )(x_tm, theta_eff, phi_eff, w_ih0, w_hh0, b0, w_cat, b_hi,
      params["w1_t"], params["b1"], w2_p, b2_p)

    return out[:B, :O]


# ----------------------------------------------------------------------------
# Pure-JAX reference (mirrors the PyTorch forward, eval mode)
# ----------------------------------------------------------------------------
def reference_forward(x, params, noise_key):
    B, T, _ = x.shape
    H = params["theta"].shape[1]
    L = params["w_ih_t"].shape[0]

    k1, k2 = jax.random.split(noise_key)
    theta_eff = params["theta"] + 0.01 * jax.random.normal(k1, params["theta"].shape, jnp.float32)
    phi_eff = params["phi"] + 0.01 * jax.random.normal(k2, params["phi"].shape, jnp.float32)

    re = jnp.einsum("bti,ih->bth", x, jnp.cos(theta_eff))
    im = jnp.einsum("bti,ih->bth", x, jnp.sin(phi_eff))
    seq = jnp.sqrt(re * re + im * im)                                 # (B, T, H)

    h = jnp.zeros((B, H), jnp.float32)
    for layer in range(L):
        w_ih = params["w_ih_t"][layer]
        w_hh = params["w_hh_t"][layer]
        bias = params["b"][layer]
        h = jnp.zeros((B, H), jnp.float32)
        c = jnp.zeros((B, H), jnp.float32)
        outs = []
        for t in range(T):
            g = seq[:, t, :] @ w_ih + h @ w_hh + bias
            i_g = jax.nn.sigmoid(g[:, 0 * H:1 * H])
            f_g = jax.nn.sigmoid(g[:, 1 * H:2 * H])
            g_g = jnp.tanh(g[:, 2 * H:3 * H])
            o_g = jax.nn.sigmoid(g[:, 3 * H:4 * H])
            c = f_g * c + i_g * g_g
            h = o_g * jnp.tanh(c)
            outs.append(h)
        seq = jnp.stack(outs, axis=1)                                 # (B, T, H)

    z = jnp.maximum(h @ params["w1_t"] + params["b1"], 0.0)
    return z @ params["w2_t"] + params["b2"]


# ----------------------------------------------------------------------------
# Parameter init (deterministic; shapes mirror the PyTorch module __init__)
# ----------------------------------------------------------------------------
def init_params(key, input_size, hidden_size, num_layers, output_size):
    keys = iter(jax.random.split(key, 2 + 4 * num_layers + 4))
    p = {}
    p["theta"] = 0.02 * jax.random.normal(next(keys), (input_size, hidden_size), jnp.float32)
    p["phi"] = 0.02 * jax.random.normal(next(keys), (input_size, hidden_size), jnp.float32)

    scale = 1.0 / float(hidden_size) ** 0.5
    w_ih_t, w_hh_t, b = [], [], []
    for _ in range(num_layers):
        in_sz = hidden_size  # nn.LSTM(hidden_size, hidden_size, ...): Hin == H for all layers
        w_ih = scale * jax.random.normal(next(keys), (4 * hidden_size, in_sz), jnp.float32)
        w_hh = scale * jax.random.normal(next(keys), (4 * hidden_size, hidden_size), jnp.float32)
        b_ih = scale * jax.random.normal(next(keys), (4 * hidden_size,), jnp.float32)
        b_hh = scale * jax.random.normal(next(keys), (4 * hidden_size,), jnp.float32)
        w_ih_t.append(w_ih.T)                     # (Hin, 4H), gate order i,f,g,o along columns
        w_hh_t.append(w_hh.T)                     # (H, 4H)
        b.append((b_ih + b_hh)[None, :])          # (1, 4H)
    p["w_ih_t"] = jnp.stack(w_ih_t)               # (L, H, 4H)
    p["w_hh_t"] = jnp.stack(w_hh_t)               # (L, H, 4H)
    p["b"] = jnp.stack(b)                         # (L, 1, 4H)

    p["w1_t"] = scale * jax.random.normal(next(keys), (hidden_size, hidden_size), jnp.float32)
    p["b1"] = scale * jax.random.normal(next(keys), (1, hidden_size), jnp.float32)
    p["w2_t"] = scale * jax.random.normal(next(keys), (hidden_size, output_size), jnp.float32)
    p["b2"] = scale * jax.random.normal(next(keys), (1, output_size), jnp.float32)
    return p


if __name__ == "__main__":
    INPUT_SIZE = 4
    HIDDEN_SIZE = 32
    NUM_LAYERS = 2
    OUTPUT_SIZE = 1
    BATCH = 2
    SEQ = 8

    key = jax.random.PRNGKey(0)
    k_params, k_x, k_noise = jax.random.split(key, 3)

    params = init_params(k_params, INPUT_SIZE, HIDDEN_SIZE, NUM_LAYERS, OUTPUT_SIZE)
    x = jax.random.normal(k_x, (BATCH, SEQ, INPUT_SIZE), jnp.float32)

    out = enhanced_quantum_lstm_forward(x, params, k_noise)
    out = jax.block_until_ready(out)

    assert out.shape == (BATCH, OUTPUT_SIZE)
    assert bool(jnp.all(jnp.isfinite(out)))

    ref = reference_forward(x, params, k_noise)
    assert bool(jnp.allclose(out, ref, atol=1e-2, rtol=1e-2)), (out, ref)

    print("KERNEL_OK")
</pallas_src>

<mosaic_0001>
module attributes {stable_mosaic.version = 11 : i64} {
  func.func @fused_forward_kernel(%arg0: memref<64x4xf32, #tpu.memory_space<vmem>>, %arg1: memref<4x32xf32, #tpu.memory_space<vmem>>, %arg2: memref<4x32xf32, #tpu.memory_space<vmem>>, %arg3: memref<32x128xf32, #tpu.memory_space<vmem>>, %arg4: memref<32x128xf32, #tpu.memory_space<vmem>>, %arg5: memref<1x128xf32, #tpu.memory_space<vmem>>, %arg6: memref<1x64x128xf32, #tpu.memory_space<vmem>>, %arg7: memref<1x1x128xf32, #tpu.memory_space<vmem>>, %arg8: memref<32x32xf32, #tpu.memory_space<vmem>>, %arg9: memref<1x32xf32, #tpu.memory_space<vmem>>, %arg10: memref<32x128xf32, #tpu.memory_space<vmem>>, %arg11: memref<1x128xf32, #tpu.memory_space<vmem>>, %arg12: memref<8x128xf32, #tpu.memory_space<vmem>>) attributes {dimension_semantics = [], scalar_prefetch = 0 : i64, scratch_operands = 0 : i64, tpu.core_type = #tpu.core_type<tc>} {
    %c0 = arith.constant 0 : index
    %c0_0 = arith.constant 0 : index
    %0 = vector.load %arg0[%c0, %c0_0] : memref<64x4xf32, #tpu.memory_space<vmem>>, vector<64x4xf32>
    %c0_1 = arith.constant 0 : index
    %c0_2 = arith.constant 0 : index
    %1 = vector.load %arg1[%c0_1, %c0_2] : memref<4x32xf32, #tpu.memory_space<vmem>>, vector<4x32xf32>
    %2 = math.cos %1 : vector<4x32xf32>
    %cst = arith.constant dense<0.000000e+00> : vector<64x32xf32>
    %3 = tpu.matmul %0, %2, %cst {dimension_numbers = #tpu.dot_dimension_numbers<[1], [0], [0], [1], [0, 0, 1, 1], [], []>} : vector<64x4xf32>, vector<4x32xf32>, vector<64x32xf32> -> vector<64x32xf32>
    %c0_3 = arith.constant 0 : index
    %c0_4 = arith.constant 0 : index
    %4 = vector.load %arg2[%c0_3, %c0_4] : memref<4x32xf32, #tpu.memory_space<vmem>>, vector<4x32xf32>
    %5 = math.sin %4 : vector<4x32xf32>
    %cst_5 = arith.constant dense<0.000000e+00> : vector<64x32xf32>
    %6 = tpu.matmul %0, %5, %cst_5 {dimension_numbers = #tpu.dot_dimension_numbers<[1], [0], [0], [1], [0, 0, 1, 1], [], []>} : vector<64x4xf32>, vector<4x32xf32>, vector<64x32xf32> -> vector<64x32xf32>
    %7 = arith.mulf %3, %3 : vector<64x32xf32>
    %8 = arith.mulf %6, %6 : vector<64x32xf32>
    %9 = arith.addf %7, %8 : vector<64x32xf32>
    %10 = math.sqrt %9 : vector<64x32xf32>
    %c0_6 = arith.constant 0 : index
    %c0_7 = arith.constant 0 : index
    %11 = vector.load %arg3[%c0_6, %c0_7] : memref<32x128xf32, #tpu.memory_space<vmem>>, vector<32x128xf32>
    %cst_8 = arith.constant dense<0.000000e+00> : vector<64x128xf32>
    %12 = tpu.matmul %10, %11, %cst_8 {dimension_numbers = #tpu.dot_dimension_numbers<[1], [0], [0], [1], [0, 0, 1, 1], [], []>} : vector<64x32xf32>, vector<32x128xf32>, vector<64x128xf32> -> vector<64x128xf32>
    %c0_9 = arith.constant 0 : index
    %c0_10 = arith.constant 0 : index
    %13 = vector.load %arg5[%c0_9, %c0_10] : memref<1x128xf32, #tpu.memory_space<vmem>>, vector<1x128xf32>
    %14 = vector.broadcast %13 : vector<1x128xf32> to vector<64x128xf32>
    %15 = arith.addf %12, %14 : vector<64x128xf32>
    %c0_11 = arith.constant 0 : index
    %c0_12 = arith.constant 0 : index
    %16 = vector.load %arg4[%c0_11, %c0_12] : memref<32x128xf32, #tpu.memory_space<vmem>>, vector<32x128xf32>
    %c0_13 = arith.constant 0 : index
    %c0_14 = arith.constant 0 : index
    %c0_15 = arith.constant 0 : index
    %17 = vector.load %arg6[%c0_13, %c0_14, %c0_15] : memref<1x64x128xf32, #tpu.memory_space<vmem>>, vector<1x64x128xf32>
    %18 = vector.shape_cast %17 : vector<1x64x128xf32> to vector<64x128xf32>
    %c0_16 = arith.constant 0 : index
    %c0_17 = arith.constant 0 : index
    %c0_18 = arith.constant 0 : index
    %19 = vector.load %arg7[%c0_16, %c0_17, %c0_18] : memref<1x1x128xf32, #tpu.memory_space<vmem>>, vector<1x1x128xf32>
    %20 = vector.shape_cast %19 : vector<1x1x128xf32> to vector<1x128xf32>
    %cst_19 = arith.constant 0.000000e+00 : f32
    %21 = vector.broadcast %cst_19 : f32 to vector<8x32xf32>
    %22 = vector.extract_strided_slice %15 {offsets = [0, 0], sizes = [8, 128], strides = [1, 1]} : vector<64x128xf32> to vector<8x128xf32>
    %cst_20 = arith.constant dense<0.000000e+00> : vector<8x128xf32>
    %23 = tpu.matmul %21, %16, %cst_20 {dimension_numbers = #tpu.dot_dimension_numbers<[1], [0], [0], [1], [0, 0, 1, 1], [], []>} : vector<8x32xf32>, vector<32x128xf32>, vector<8x128xf32> -> vector<8x128xf32>
    %24 = arith.addf %22, %23 : vector<8x128xf32>
    %25 = arith.negf %24 : vector<8x128xf32>
    %26 = math.exp %25 : vector<8x128xf32>
    %cst_21 = arith.constant 1.000000e+00 : f32
    %27 = vector.broadcast %cst_21 : f32 to vector<8x128xf32>
    %28 = arith.addf %27, %26 : vector<8x128xf32>
    %29 = arith.divf %27, %28 : vector<8x128xf32>
    %30 = math.tanh %24 : vector<8x128xf32>
    %31 = vector.extract_strided_slice %29 {offsets = [0, 0], sizes = [8, 32], strides = [1, 1]} : vector<8x128xf32> to vector<8x32xf32>
    %32 = vector.extract_strided_slice %29 {offsets = [0, 32], sizes = [8, 32], strides = [1, 1]} : vector<8x128xf32> to vector<8x32xf32>
    %33 = vector.extract_strided_slice %30 {offsets = [0, 64], sizes = [8, 32], strides = [1, 1]} : vector<8x128xf32> to vector<8x32xf32>
    %34 = vector.extract_strided_slice %29 {offsets = [0, 96], sizes = [8, 32], strides = [1, 1]} : vector<8x128xf32> to vector<8x32xf32>
    %35 = arith.mulf %32, %21 : vector<8x32xf32>
    %36 = arith.mulf %31, %33 : vector<8x32xf32>
    %37 = arith.addf %35, %36 : vector<8x32xf32>
    %38 = math.tanh %37 : vector<8x32xf32>
    %39 = arith.mulf %34, %38 : vector<8x32xf32>
    %40 = vector.extract_strided_slice %15 {offsets = [8, 0], sizes = [8, 128], strides = [1, 1]} : vector<64x128xf32> to vector<8x128xf32>
    %cst_22 = arith.constant dense<0.000000e+00> : vector<8x128xf32>
    %41 = tpu.matmul %39, %16, %cst_22 {dimension_numbers = #tpu.dot_dimension_numbers<[1], [0], [0], [1], [0, 0, 1, 1], [], []>} : vector<8x32xf32>, vector<32x128xf32>, vector<8x128xf32> -> vector<8x128xf32>
    %42 = arith.addf %40, %41 : vector<8x128xf32>
    %43 = arith.negf %42 : vector<8x128xf32>
    %44 = math.exp %43 : vector<8x128xf32>
    %cst_23 = arith.constant 1.000000e+00 : f32
    %45 = vector.broadcast %cst_23 : f32 to vector<8x128xf32>
    %46 = arith.addf %45, %44 : vector<8x128xf32>
    %47 = arith.divf %45, %46 : vector<8x128xf32>
    %48 = math.tanh %42 : vector<8x128xf32>
    %49 = vector.extract_strided_slice %47 {offsets = [0, 0], sizes = [8, 32], strides = [1, 1]} : vector<8x128xf32> to vector<8x32xf32>
    %50 = vector.extract_strided_slice %47 {offsets = [0, 32], sizes = [8, 32], strides = [1, 1]} : vector<8x128xf32> to vector<8x32xf32>
    %51 = vector.extract_strided_slice %48 {offsets = [0, 64], sizes = [8, 32], strides = [1, 1]} : vector<8x128xf32> to vector<8x32xf32>
    %52 = vector.extract_strided_slice %47 {offsets = [0, 96], sizes = [8, 32], strides = [1, 1]} : vector<8x128xf32> to vector<8x32xf32>
    %53 = arith.mulf %50, %37 : vector<8x32xf32>
    %54 = arith.mulf %49, %51 : vector<8x32xf32>
    %55 = arith.addf %53, %54 : vector<8x32xf32>
    %56 = math.tanh %55 : vector<8x32xf32>
    %57 = arith.mulf %52, %56 : vector<8x32xf32>
    %58 = tpu.concatenate %39, %21 in 1 : vector<8x32xf32>, vector<8x32xf32> -> vector<8x64xf32>
    %cst_24 = arith.constant dense<0.000000e+00> : vector<8x128xf32>
    %59 = tpu.matmul %58, %18, %cst_24 {dimension_numbers = #tpu.dot_dimension_numbers<[1], [0], [0], [1], [0, 0, 1, 1], [], []>} : vector<8x64xf32>, vector<64x128xf32>, vector<8x128xf32> -> vector<8x128xf32>
    %60 = vector.broadcast %20 : vector<1x128xf32> to vector<8x128xf32>
    %61 = arith.addf %59, %60 : vector<8x128xf32>
    %62 = arith.negf %61 : vector<8x128xf32>
    %63 = math.exp %62 : vector<8x128xf32>
    %cst_25 = arith.constant 1.000000e+00 : f32
    %64 = vector.broadcast %cst_25 : f32 to vector<8x128xf32>
    %65 = arith.addf %64, %63 : vector<8x128xf32>
    %66 = arith.divf %64, %65 : vector<8x128xf32>
    %67 = math.tanh %61 : vector<8x128xf32>
    %68 = vector.extract_strided_slice %66 {offsets = [0, 0], sizes = [8, 32], strides = [1, 1]} : vector<8x128xf32> to vector<8x32xf32>
    %69 = vector.extract_strided_slice %66 {offsets = [0, 32], sizes = [8, 32], strides = [1, 1]} : vector<8x128xf32> to vector<8x32xf32>
    %70 = vector.extract_strided_slice %67 {offsets = [0, 64], sizes = [8, 32], strides = [1, 1]} : vector<8x128xf32> to vector<8x32xf32>
    %71 = vector.extract_strided_slice %66 {offsets = [0, 96], sizes = [8, 32], strides = [1, 1]} : vector<8x128xf32> to vector<8x32xf32>
    %72 = arith.mulf %69, %21 : vector<8x32xf32>
    %73 = arith.mulf %68, %70 : vector<8x32xf32>
    %74 = arith.addf %72, %73 : vector<8x32xf32>
    %75 = math.tanh %74 : vector<8x32xf32>
    %76 = arith.mulf %71, %75 : vector<8x32xf32>
    %77 = vector.extract_strided_slice %15 {offsets = [16, 0], sizes = [8, 128], strides = [1, 1]} : vector<64x128xf32> to vector<8x128xf32>
    %cst_26 = arith.constant dense<0.000000e+00> : vector<8x128xf32>
    %78 = tpu.matmul %57, %16, %cst_26 {dimension_numbers = #tpu.dot_dimension_numbers<[1], [0], [0], [1], [0, 0, 1, 1], [], []>} : vector<8x32xf32>, vector<32x128xf32>, vector<8x128xf32> -> vector<8x128xf32>
    %79 = arith.addf %77, %78 : vector<8x128xf32>
    %80 = arith.negf %79 : vector<8x128xf32>
    %81 = math.exp %80 : vector<8x128xf32>
    %cst_27 = arith.constant 1.000000e+00 : f32
    %82 = vector.broadcast %cst_27 : f32 to vector<8x128xf32>
    %83 = arith.addf %82, %81 : vector<8x128xf32>
    %84 = arith.divf %82, %83 : vector<8x128xf32>
    %85 = math.tanh %79 : vector<8x128xf32>
    %86 = vector.extract_strided_slice %84 {offsets = [0, 0], sizes = [8, 32], strides = [1, 1]} : vector<8x128xf32> to vector<8x32xf32>
    %87 = vector.extract_strided_slice %84 {offsets = [0, 32], sizes = [8, 32], strides = [1, 1]} : vector<8x128xf32> to vector<8x32xf32>
    %88 = vector.extract_strided_slice %85 {offsets = [0, 64], sizes = [8, 32], strides = [1, 1]} : vector<8x128xf32> to vector<8x32xf32>
    %89 = vector.extract_strided_slice %84 {offsets = [0, 96], sizes = [8, 32], strides = [1, 1]} : vector<8x128xf32> to vector<8x32xf32>
    %90 = arith.mulf %87, %55 : vector<8x32xf32>
    %91 = arith.mulf %86, %88 : vector<8x32xf32>
    %92 = arith.addf %90, %91 : vector<8x32xf32>
    %93 = math.tanh %92 : vector<8x32xf32>
    %94 = arith.mulf %89, %93 : vector<8x32xf32>
    %95 = tpu.concatenate %57, %76 in 1 : vector<8x32xf32>, vector<8x32xf32> -> vector<8x64xf32>
    %cst_28 = arith.constant dense<0.000000e+00> : vector<8x128xf32>
    %96 = tpu.matmul %95, %18, %cst_28 {dimension_numbers = #tpu.dot_dimension_numbers<[1], [0], [0], [1], [0, 0, 1, 1], [], []>} : vector<8x64xf32>, vector<64x128xf32>, vector<8x128xf32> -> vector<8x128xf32>
    %97 = vector.broadcast %20 : vector<1x128xf32> to vector<8x128xf32>
    %98 = arith.addf %96, %97 : vector<8x128xf32>
    %99 = arith.negf %98 : vector<8x128xf32>
    %100 = math.exp %99 : vector<8x128xf32>
    %cst_29 = arith.constant 1.000000e+00 : f32
    %101 = vector.broadcast %cst_29 : f32 to vector<8x128xf32>
    %102 = arith.addf %101, %100 : vector<8x128xf32>
    %103 = arith.divf %101, %102 : vector<8x128xf32>
    %104 = math.tanh %98 : vector<8x128xf32>
    %105 = vector.extract_strided_slice %103 {offsets = [0, 0], sizes = [8, 32], strides = [1, 1]} : vector<8x128xf32> to vector<8x32xf32>
    %106 = vector.extract_strided_slice %103 {offsets = [0, 32], sizes = [8, 32], strides = [1, 1]} : vector<8x128xf32> to vector<8x32xf32>
    %107 = vector.extract_strided_slice %104 {offsets = [0, 64], sizes = [8, 32], strides = [1, 1]} : vector<8x128xf32> to vector<8x32xf32>
    %108 = vector.extract_strided_slice %103 {offsets = [0, 96], sizes = [8, 32], strides = [1, 1]} : vector<8x128xf32> to vector<8x32xf32>
    %109 = arith.mulf %106, %74 : vector<8x32xf32>
    %110 = arith.mulf %105, %107 : vector<8x32xf32>
    %111 = arith.addf %109, %110 : vector<8x32xf32>
    %112 = math.tanh %111 : vector<8x32xf32>
    %113 = arith.mulf %108, %112 : vector<8x32xf32>
    %114 = vector.extract_strided_slice %15 {offsets = [24, 0], sizes = [8, 128], strides = [1, 1]} : vector<64x128xf32> to vector<8x128xf32>
    %cst_30 = arith.constant dense<0.000000e+00> : vector<8x128xf32>
    %115 = tpu.matmul %94, %16, %cst_30 {dimension_numbers = #tpu.dot_dimension_numbers<[1], [0], [0], [1], [0, 0, 1, 1], [], []>} : vector<8x32xf32>, vector<32x128xf32>, vector<8x128xf32> -> vector<8x128xf32>
    %116 = arith.addf %114, %115 : vector<8x128xf32>
    %117 = arith.negf %116 : vector<8x128xf32>
    %118 = math.exp %117 : vector<8x128xf32>
    %cst_31 = arith.constant 1.000000e+00 : f32
    %119 = vector.broadcast %cst_31 : f32 to vector<8x128xf32>
    %120 = arith.addf %119, %118 : vector<8x128xf32>
    %121 = arith.divf %119, %120 : vector<8x128xf32>
    %122 = math.tanh %116 : vector<8x128xf32>
    %123 = vector.extract_strided_slice %121 {offsets = [0, 0], sizes = [8, 32], strides = [1, 1]} : vector<8x128xf32> to vector<8x32xf32>
    %124 = vector.extract_strided_slice %121 {offsets = [0, 32], sizes = [8, 32], strides = [1, 1]} : vector<8x128xf32> to vector<8x32xf32>
    %125 = vector.extract_strided_slice %122 {offsets = [0, 64], sizes = [8, 32], strides = [1, 1]} : vector<8x128xf32> to vector<8x32xf32>
    %126 = vector.extract_strided_slice %121 {offsets = [0, 96], sizes = [8, 32], strides = [1, 1]} : vector<8x128xf32> to vector<8x32xf32>
    %127 = arith.mulf %124, %92 : vector<8x32xf32>
    %128 = arith.mulf %123, %125 : vector<8x32xf32>
    %129 = arith.addf %127, %128 : vector<8x32xf32>
    %130 = math.tanh %129 : vector<8x32xf32>
    %131 = arith.mulf %126, %130 : vector<8x32xf32>
    %132 = tpu.concatenate %94, %113 in 1 : vector<8x32xf32>, vector<8x32xf32> -> vector<8x64xf32>
    %cst_32 = arith.constant dense<0.000000e+00> : vector<8x128xf32>
    %133 = tpu.matmul %132, %18, %cst_32 {dimension_numbers = #tpu.dot_dimension_numbers<[1], [0], [0], [1], [0, 0, 1, 1], [], []>} : vector<8x64xf32>, vector<64x128xf32>, vector<8x128xf32> -> vector<8x128xf32>
    %134 = vector.broadcast %20 : vector<1x128xf32> to vector<8x128xf32>
    %135 = arith.addf %133, %134 : vector<8x128xf32>
    %136 = arith.negf %135 : vector<8x128xf32>
    %137 = math.exp %136 : vector<8x128xf32>
    %cst_33 = arith.constant 1.000000e+00 : f32
    %138 = vector.broadcast %cst_33 : f32 to vector<8x128xf32>
    %139 = arith.addf %138, %137 : vector<8x128xf32>
    %140 = arith.divf %138, %139 : vector<8x128xf32>
    %141 = math.tanh %135 : vector<8x128xf32>
    %142 = vector.extract_strided_slice %140 {offsets = [0, 0], sizes = [8, 32], strides = [1, 1]} : vector<8x128xf32> to vector<8x32xf32>
    %143 = vector.extract_strided_slice %140 {offsets = [0, 32], sizes = [8, 32], strides = [1, 1]} : vector<8x128xf32> to vector<8x32xf32>
    %144 = vector.extract_strided_slice %141 {offsets = [0, 64], sizes = [8, 32], strides = [1, 1]} : vector<8x128xf32> to vector<8x32xf32>
    %145 = vector.extract_strided_slice %140 {offsets = [0, 96], sizes = [8, 32], strides = [1, 1]} : vector<8x128xf32> to vector<8x32xf32>
    %146 = arith.mulf %143, %111 : vector<8x32xf32>
    %147 = arith.mulf %142, %144 : vector<8x32xf32>
    %148 = arith.addf %146, %147 : vector<8x32xf32>
    %149 = math.tanh %148 : vector<8x32xf32>
    %150 = arith.mulf %145, %149 : vector<8x32xf32>
    %151 = vector.extract_strided_slice %15 {offsets = [32, 0], sizes = [8, 128], strides = [1, 1]} : vector<64x128xf32> to vector<8x128xf32>
    %cst_34 = arith.constant dense<0.000000e+00> : vector<8x128xf32>
    %152 = tpu.matmul %131, %16, %cst_34 {dimension_numbers = #tpu.dot_dimension_numbers<[1], [0], [0], [1], [0, 0, 1, 1], [], []>} : vector<8x32xf32>, vector<32x128xf32>, vector<8x128xf32> -> vector<8x128xf32>
    %153 = arith.addf %151, %152 : vector<8x128xf32>
    %154 = arith.negf %153 : vector<8x128xf32>
    %155 = math.exp %154 : vector<8x128xf32>
    %cst_35 = arith.constant 1.000000e+00 : f32
    %156 = vector.broadcast %cst_35 : f32 to vector<8x128xf32>
    %157 = arith.addf %156, %155 : vector<8x128xf32>
    %158 = arith.divf %156, %157 : vector<8x128xf32>
    %159 = math.tanh %153 : vector<8x128xf32>
    %160 = vector.extract_strided_slice %158 {offsets = [0, 0], sizes = [8, 32], strides = [1, 1]} : vector<8x128xf32> to vector<8x32xf32>
    %161 = vector.extract_strided_slice %158 {offsets = [0, 32], sizes = [8, 32], strides = [1, 1]} : vector<8x128xf32> to vector<8x32xf32>
    %162 = vector.extract_strided_slice %159 {offsets = [0, 64], sizes = [8, 32], strides = [1, 1]} : vector<8x128xf32> to vector<8x32xf32>
    %163 = vector.extract_strided_slice %158 {offsets = [0, 96], sizes = [8, 32], strides = [1, 1]} : vector<8x128xf32> to vector<8x32xf32>
    %164 = arith.mulf %161, %129 : vector<8x32xf32>
    %165 = arith.mulf %160, %162 : vector<8x32xf32>
    %166 = arith.addf %164, %165 : vector<8x32xf32>
    %167 = math.tanh %166 : vector<8x32xf32>
    %168 = arith.mulf %163, %167 : vector<8x32xf32>
    %169 = tpu.concatenate %131, %150 in 1 : vector<8x32xf32>, vector<8x32xf32> -> vector<8x64xf32>
    %cst_36 = arith.constant dense<0.000000e+00> : vector<8x128xf32>
    %170 = tpu.matmul %169, %18, %cst_36 {dimension_numbers = #tpu.dot_dimension_numbers<[1], [0], [0], [1], [0, 0, 1, 1], [], []>} : vector<8x64xf32>, vector<64x128xf32>, vector<8x128xf32> -> vector<8x128xf32>
    %171 = vector.broadcast %20 : vector<1x128xf32> to vector<8x128xf32>
    %172 = arith.addf %170, %171 : vector<8x128xf32>
    %173 = arith.negf %172 : vector<8x128xf32>
    %174 = math.exp %173 : vector<8x128xf32>
    %cst_37 = arith.constant 1.000000e+00 : f32
    %175 = vector.broadcast %cst_37 : f32 to vector<8x128xf32>
    %176 = arith.addf %175, %174 : vector<8x128xf32>
    %177 = arith.divf %175, %176 : vector<8x128xf32>
    %178 = math.tanh %172 : vector<8x128xf32>
    %179 = vector.extract_strided_slice %177 {offsets = [0, 0], sizes = [8, 32], strides = [1, 1]} : vector<8x128xf32> to vector<8x32xf32>
    %180 = vector.extract_strided_slice %177 {offsets = [0, 32], sizes = [8, 32], strides = [1, 1]} : vector<8x128xf32> to vector<8x32xf32>
    %181 = vector.extract_strided_slice %178 {offsets = [0, 64], sizes = [8, 32], strides = [1, 1]} : vector<8x128xf32> to vector<8x32xf32>
    %182 = vector.extract_strided_slice %177 {offsets = [0, 96], sizes = [8, 32], strides = [1, 1]} : vector<8x128xf32> to vector<8x32xf32>
    %183 = arith.mulf %180, %148 : vector<8x32xf32>
    %184 = arith.mulf %179, %181 : vector<8x32xf32>
    %185 = arith.addf %183, %184 : vector<8x32xf32>
    %186 = math.tanh %185 : vector<8x32xf32>
    %187 = arith.mulf %182, %186 : vector<8x32xf32>
    %188 = vector.extract_strided_slice %15 {offsets = [40, 0], sizes = [8, 128], strides = [1, 1]} : vector<64x128xf32> to vector<8x128xf32>
    %cst_38 = arith.constant dense<0.000000e+00> : vector<8x128xf32>
    %189 = tpu.matmul %168, %16, %cst_38 {dimension_numbers = #tpu.dot_dimension_numbers<[1], [0], [0], [1], [0, 0, 1, 1], [], []>} : vector<8x32xf32>, vector<32x128xf32>, vector<8x128xf32> -> vector<8x128xf32>
    %190 = arith.addf %188, %189 : vector<8x128xf32>
    %191 = arith.negf %190 : vector<8x128xf32>
    %192 = math.exp %191 : vector<8x128xf32>
    %cst_39 = arith.constant 1.000000e+00 : f32
    %193 = vector.broadcast %cst_39 : f32 to vector<8x128xf32>
    %194 = arith.addf %193, %192 : vector<8x128xf32>
    %195 = arith.divf %193, %194 : vector<8x128xf32>
    %196 = math.tanh %190 : vector<8x128xf32>
    %197 = vector.extract_strided_slice %195 {offsets = [0, 0], sizes = [8, 32], strides = [1, 1]} : vector<8x128xf32> to vector<8x32xf32>
    %198 = vector.extract_strided_slice %195 {offsets = [0, 32], sizes = [8, 32], strides = [1, 1]} : vector<8x128xf32> to vector<8x32xf32>
    %199 = vector.extract_strided_slice %196 {offsets = [0, 64], sizes = [8, 32], strides = [1, 1]} : vector<8x128xf32> to vector<8x32xf32>
    %200 = vector.extract_strided_slice %195 {offsets = [0, 96], sizes = [8, 32], strides = [1, 1]} : vector<8x128xf32> to vector<8x32xf32>
    %201 = arith.mulf %198, %166 : vector<8x32xf32>
    %202 = arith.mulf %197, %199 : vector<8x32xf32>
    %203 = arith.addf %201, %202 : vector<8x32xf32>
    %204 = math.tanh %203 : vector<8x32xf32>
    %205 = arith.mulf %200, %204 : vector<8x32xf32>
    %206 = tpu.concatenate %168, %187 in 1 : vector<8x32xf32>, vector<8x32xf32> -> vector<8x64xf32>
    %cst_40 = arith.constant dense<0.000000e+00> : vector<8x128xf32>
    %207 = tpu.matmul %206, %18, %cst_40 {dimension_numbers = #tpu.dot_dimension_numbers<[1], [0], [0], [1], [0, 0, 1, 1], [], []>} : vector<8x64xf32>, vector<64x128xf32>, vector<8x128xf32> -> vector<8x128xf32>
    %208 = vector.broadcast %20 : vector<1x128xf32> to vector<8x128xf32>
    %209 = arith.addf %207, %208 : vector<8x128xf32>
    %210 = arith.negf %209 : vector<8x128xf32>
    %211 = math.exp %210 : vector<8x128xf32>
    %cst_41 = arith.constant 1.000000e+00 : f32
    %212 = vector.broadcast %cst_41 : f32 to vector<8x128xf32>
    %213 = arith.addf %212, %211 : vector<8x128xf32>
    %214 = arith.divf %212, %213 : vector<8x128xf32>
    %215 = math.tanh %209 : vector<8x128xf32>
    %216 = vector.extract_strided_slice %214 {offsets = [0, 0], sizes = [8, 32], strides = [1, 1]} : vector<8x128xf32> to vector<8x32xf32>
    %217 = vector.extract_strided_slice %214 {offsets = [0, 32], sizes = [8, 32], strides = [1, 1]} : vector<8x128xf32> to vector<8x32xf32>
    %218 = vector.extract_strided_slice %215 {offsets = [0, 64], sizes = [8, 32], strides = [1, 1]} : vector<8x128xf32> to vector<8x32xf32>
    %219 = vector.extract_strided_slice %214 {offsets = [0, 96], sizes = [8, 32], strides = [1, 1]} : vector<8x128xf32> to vector<8x32xf32>
    %220 = arith.mulf %217, %185 : vector<8x32xf32>
    %221 = arith.mulf %216, %218 : vector<8x32xf32>
    %222 = arith.addf %220, %221 : vector<8x32xf32>
    %223 = math.tanh %222 : vector<8x32xf32>
    %224 = arith.mulf %219, %223 : vector<8x32xf32>
    %225 = vector.extract_strided_slice %15 {offsets = [48, 0], sizes = [8, 128], strides = [1, 1]} : vector<64x128xf32> to vector<8x128xf32>
    %cst_42 = arith.constant dense<0.000000e+00> : vector<8x128xf32>
    %226 = tpu.matmul %205, %16, %cst_42 {dimension_numbers = #tpu.dot_dimension_numbers<[1], [0], [0], [1], [0, 0, 1, 1], [], []>} : vector<8x32xf32>, vector<32x128xf32>, vector<8x128xf32> -> vector<8x128xf32>
    %227 = arith.addf %225, %226 : vector<8x128xf32>
    %228 = arith.negf %227 : vector<8x128xf32>
    %229 = math.exp %228 : vector<8x128xf32>
    %cst_43 = arith.constant 1.000000e+00 : f32
    %230 = vector.broadcast %cst_43 : f32 to vector<8x128xf32>
    %231 = arith.addf %230, %229 : vector<8x128xf32>
    %232 = arith.divf %230, %231 : vector<8x128xf32>
    %233 = math.tanh %227 : vector<8x128xf32>
    %234 = vector.extract_strided_slice %232 {offsets = [0, 0], sizes = [8, 32], strides = [1, 1]} : vector<8x128xf32> to vector<8x32xf32>
    %235 = vector.extract_strided_slice %232 {offsets = [0, 32], sizes = [8, 32], strides = [1, 1]} : vector<8x128xf32> to vector<8x32xf32>
    %236 = vector.extract_strided_slice %233 {offsets = [0, 64], sizes = [8, 32], strides = [1, 1]} : vector<8x128xf32> to vector<8x32xf32>
    %237 = vector.extract_strided_slice %232 {offsets = [0, 96], sizes = [8, 32], strides = [1, 1]} : vector<8x128xf32> to vector<8x32xf32>
    %238 = arith.mulf %235, %203 : vector<8x32xf32>
    %239 = arith.mulf %234, %236 : vector<8x32xf32>
    %240 = arith.addf %238, %239 : vector<8x32xf32>
    %241 = math.tanh %240 : vector<8x32xf32>
    %242 = arith.mulf %237, %241 : vector<8x32xf32>
    %243 = tpu.concatenate %205, %224 in 1 : vector<8x32xf32>, vector<8x32xf32> -> vector<8x64xf32>
    %cst_44 = arith.constant dense<0.000000e+00> : vector<8x128xf32>
    %244 = tpu.matmul %243, %18, %cst_44 {dimension_numbers = #tpu.dot_dimension_numbers<[1], [0], [0], [1], [0, 0, 1, 1], [], []>} : vector<8x64xf32>, vector<64x128xf32>, vector<8x128xf32> -> vector<8x128xf32>
    %245 = vector.broadcast %20 : vector<1x128xf32> to vector<8x128xf32>
    %246 = arith.addf %244, %245 : vector<8x128xf32>
    %247 = arith.negf %246 : vector<8x128xf32>
    %248 = math.exp %247 : vector<8x128xf32>
    %cst_45 = arith.constant 1.000000e+00 : f32
    %249 = vector.broadcast %cst_45 : f32 to vector<8x128xf32>
    %250 = arith.addf %249, %248 : vector<8x128xf32>
    %251 = arith.divf %249, %250 : vector<8x128xf32>
    %252 = math.tanh %246 : vector<8x128xf32>
    %253 = vector.extract_strided_slice %251 {offsets = [0, 0], sizes = [8, 32], strides = [1, 1]} : vector<8x128xf32> to vector<8x32xf32>
    %254 = vector.extract_strided_slice %251 {offsets = [0, 32], sizes = [8, 32], strides = [1, 1]} : vector<8x128xf32> to vector<8x32xf32>
    %255 = vector.extract_strided_slice %252 {offsets = [0, 64], sizes = [8, 32], strides = [1, 1]} : vector<8x128xf32> to vector<8x32xf32>
    %256 = vector.extract_strided_slice %251 {offsets = [0, 96], sizes = [8, 32], strides = [1, 1]} : vector<8x128xf32> to vector<8x32xf32>
    %257 = arith.mulf %254, %222 : vector<8x32xf32>
    %258 = arith.mulf %253, %255 : vector<8x32xf32>
    %259 = arith.addf %257, %258 : vector<8x32xf32>
    %260 = math.tanh %259 : vector<8x32xf32>
    %261 = arith.mulf %256, %260 : vector<8x32xf32>
    %262 = vector.extract_strided_slice %15 {offsets = [56, 0], sizes = [8, 128], strides = [1, 1]} : vector<64x128xf32> to vector<8x128xf32>
    %cst_46 = arith.constant dense<0.000000e+00> : vector<8x128xf32>
    %263 = tpu.matmul %242, %16, %cst_46 {dimension_numbers = #tpu.dot_dimension_numbers<[1], [0], [0], [1], [0, 0, 1, 1], [], []>} : vector<8x32xf32>, vector<32x128xf32>, vector<8x128xf32> -> vector<8x128xf32>
    %264 = arith.addf %262, %263 : vector<8x128xf32>
    %265 = arith.negf %264 : vector<8x128xf32>
    %266 = math.exp %265 : vector<8x128xf32>
    %cst_47 = arith.constant 1.000000e+00 : f32
    %267 = vector.broadcast %cst_47 : f32 to vector<8x128xf32>
    %268 = arith.addf %267, %266 : vector<8x128xf32>
    %269 = arith.divf %267, %268 : vector<8x128xf32>
    %270 = math.tanh %264 : vector<8x128xf32>
    %271 = vector.extract_strided_slice %269 {offsets = [0, 0], sizes = [8, 32], strides = [1, 1]} : vector<8x128xf32> to vector<8x32xf32>
    %272 = vector.extract_strided_slice %269 {offsets = [0, 32], sizes = [8, 32], strides = [1, 1]} : vector<8x128xf32> to vector<8x32xf32>
    %273 = vector.extract_strided_slice %270 {offsets = [0, 64], sizes = [8, 32], strides = [1, 1]} : vector<8x128xf32> to vector<8x32xf32>
    %274 = vector.extract_strided_slice %269 {offsets = [0, 96], sizes = [8, 32], strides = [1, 1]} : vector<8x128xf32> to vector<8x32xf32>
    %275 = arith.mulf %272, %240 : vector<8x32xf32>
    %276 = arith.mulf %271, %273 : vector<8x32xf32>
    %277 = arith.addf %275, %276 : vector<8x32xf32>
    %278 = math.tanh %277 : vector<8x32xf32>
    %279 = arith.mulf %274, %278 : vector<8x32xf32>
    %280 = tpu.concatenate %242, %261 in 1 : vector<8x32xf32>, vector<8x32xf32> -> vector<8x64xf32>
    %cst_48 = arith.constant dense<0.000000e+00> : vector<8x128xf32>
    %281 = tpu.matmul %280, %18, %cst_48 {dimension_numbers = #tpu.dot_dimension_numbers<[1], [0], [0], [1], [0, 0, 1, 1], [], []>} : vector<8x64xf32>, vector<64x128xf32>, vector<8x128xf32> -> vector<8x128xf32>
    %282 = vector.broadcast %20 : vector<1x128xf32> to vector<8x128xf32>
    %283 = arith.addf %281, %282 : vector<8x128xf32>
    %284 = arith.negf %283 : vector<8x128xf32>
    %285 = math.exp %284 : vector<8x128xf32>
    %cst_49 = arith.constant 1.000000e+00 : f32
    %286 = vector.broadcast %cst_49 : f32 to vector<8x128xf32>
    %287 = arith.addf %286, %285 : vector<8x128xf32>
    %288 = arith.divf %286, %287 : vector<8x128xf32>
    %289 = math.tanh %283 : vector<8x128xf32>
    %290 = vector.extract_strided_slice %288 {offsets = [0, 0], sizes = [8, 32], strides = [1, 1]} : vector<8x128xf32> to vector<8x32xf32>
    %291 = vector.extract_strided_slice %288 {offsets = [0, 32], sizes = [8, 32], strides = [1, 1]} : vector<8x128xf32> to vector<8x32xf32>
    %292 = vector.extract_strided_slice %289 {offsets = [0, 64], sizes = [8, 32], strides = [1, 1]} : vector<8x128xf32> to vector<8x32xf32>
    %293 = vector.extract_strided_slice %288 {offsets = [0, 96], sizes = [8, 32], strides = [1, 1]} : vector<8x128xf32> to vector<8x32xf32>
    %294 = arith.mulf %291, %259 : vector<8x32xf32>
    %295 = arith.mulf %290, %292 : vector<8x32xf32>
    %296 = arith.addf %294, %295 : vector<8x32xf32>
    %297 = math.tanh %296 : vector<8x32xf32>
    %298 = arith.mulf %293, %297 : vector<8x32xf32>
    %299 = tpu.concatenate %279, %298 in 1 : vector<8x32xf32>, vector<8x32xf32> -> vector<8x64xf32>
    %cst_50 = arith.constant dense<0.000000e+00> : vector<8x128xf32>
    %300 = tpu.matmul %299, %18, %cst_50 {dimension_numbers = #tpu.dot_dimension_numbers<[1], [0], [0], [1], [0, 0, 1, 1], [], []>} : vector<8x64xf32>, vector<64x128xf32>, vector<8x128xf32> -> vector<8x128xf32>
    %301 = vector.broadcast %20 : vector<1x128xf32> to vector<8x128xf32>
    %302 = arith.addf %300, %301 : vector<8x128xf32>
    %303 = arith.negf %302 : vector<8x128xf32>
    %304 = math.exp %303 : vector<8x128xf32>
    %cst_51 = arith.constant 1.000000e+00 : f32
    %305 = vector.broadcast %cst_51 : f32 to vector<8x128xf32>
    %306 = arith.addf %305, %304 : vector<8x128xf32>
    %307 = arith.divf %305, %306 : vector<8x128xf32>
    %308 = math.tanh %302 : vector<8x128xf32>
    %309 = vector.extract_strided_slice %307 {offsets = [0, 0], sizes = [8, 32], strides = [1, 1]} : vector<8x128xf32> to vector<8x32xf32>
    %310 = vector.extract_strided_slice %307 {offsets = [0, 32], sizes = [8, 32], strides = [1, 1]} : vector<8x128xf32> to vector<8x32xf32>
    %311 = vector.extract_strided_slice %308 {offsets = [0, 64], sizes = [8, 32], strides = [1, 1]} : vector<8x128xf32> to vector<8x32xf32>
    %312 = vector.extract_strided_slice %307 {offsets = [0, 96], sizes = [8, 32], strides = [1, 1]} : vector<8x128xf32> to vector<8x32xf32>
    %313 = arith.mulf %310, %296 : vector<8x32xf32>
    %314 = arith.mulf %309, %311 : vector<8x32xf32>
    %315 = arith.addf %313, %314 : vector<8x32xf32>
    %316 = math.tanh %315 : vector<8x32xf32>
    %317 = arith.mulf %312, %316 : vector<8x32xf32>
    %c0_52 = arith.constant 0 : index
    %c0_53 = arith.constant 0 : index
    %318 = vector.load %arg8[%c0_52, %c0_53] : memref<32x32xf32, #tpu.memory_space<vmem>>, vector<32x32xf32>
    %cst_54 = arith.constant dense<0.000000e+00> : vector<8x32xf32>
    %319 = tpu.matmul %317, %318, %cst_54 {dimension_numbers = #tpu.dot_dimension_numbers<[1], [0], [0], [1], [0, 0, 1, 1], [], []>} : vector<8x32xf32>, vector<32x32xf32>, vector<8x32xf32> -> vector<8x32xf32>
    %c0_55 = arith.constant 0 : index
    %c0_56 = arith.constant 0 : index
    %320 = vector.load %arg9[%c0_55, %c0_56] : memref<1x32xf32, #tpu.memory_space<vmem>>, vector<1x32xf32>
    %321 = vector.broadcast %320 : vector<1x32xf32> to vector<8x32xf32>
    %322 = arith.addf %319, %321 : vector<8x32xf32>
    %cst_57 = arith.constant 0.000000e+00 : f32
    %323 = vector.broadcast %cst_57 : f32 to vector<8x32xf32>
    %324 = arith.maximumf %322, %323 : vector<8x32xf32>
    %c0_58 = arith.constant 0 : index
    %c0_59 = arith.constant 0 : index
    %325 = vector.load %arg10[%c0_58, %c0_59] : memref<32x128xf32, #tpu.memory_space<vmem>>, vector<32x128xf32>
    %cst_60 = arith.constant dense<0.000000e+00> : vector<8x128xf32>
    %326 = tpu.matmul %324, %325, %cst_60 {dimension_numbers = #tpu.dot_dimension_numbers<[1], [0], [0], [1], [0, 0, 1, 1], [], []>} : vector<8x32xf32>, vector<32x128xf32>, vector<8x128xf32> -> vector<8x128xf32>
    %c0_61 = arith.constant 0 : index
    %c0_62 = arith.constant 0 : index
    %327 = vector.load %arg11[%c0_61, %c0_62] : memref<1x128xf32, #tpu.memory_space<vmem>>, vector<1x128xf32>
    %328 = vector.broadcast %327 : vector<1x128xf32> to vector<8x128xf32>
    %329 = arith.addf %326, %328 : vector<8x128xf32>
    %c0_63 = arith.constant 0 : index
    %c0_64 = arith.constant 0 : index
    %330 = vector.load %arg12[%c0_63, %c0_64] : memref<8x128xf32, #tpu.memory_space<vmem>>, vector<8x128xf32>
    tpu.vector_store %arg12[%c0_63, %c0_64], %329 {strides = array<i32>} : memref<8x128xf32, #tpu.memory_space<vmem>>, vector<8x128xf32>,
    return
  }
}

</mosaic_0001>

<llo_original>
// kernel: enhanced_quantum_lstm_forward.3
$region0: #{enhanced_quantum_lstm_forward.3}
  #allocation0 [shape = 'u32[]', space=smem, size = 0x4, offset = 0x4, fixed_abs, tag = 'smem constant byte address 0x4 - core index']
  #allocation1 [shape = 'u32[144,128]{1,0:T(1,128)}', space=vmem, size = 0x12000, scoped, tag = 'internal scratch']
  %s0 = inlined_call_operand.vmem [shape: f32[64,4], index: 0, kind: input, shape index: {}]
  %s1 = inlined_call_operand.vmem [shape: f32[4,32], index: 1, kind: input, shape index: {}]
  %s2 = inlined_call_operand.vmem [shape: f32[4,32], index: 2, kind: input, shape index: {}]
  %s3 = inlined_call_operand.vmem [shape: f32[32,128], index: 3, kind: input, shape index: {}]
  %s4 = inlined_call_operand.vmem [shape: f32[32,128], index: 4, kind: input, shape index: {}]
  %s5 = inlined_call_operand.vmem [shape: f32[1,128], index: 5, kind: input, shape index: {}]
  %s6 = inlined_call_operand.vmem [shape: f32[1,64,128], index: 6, kind: input, shape index: {}]
  %s7 = inlined_call_operand.vmem [shape: f32[1,1,128], index: 7, kind: input, shape index: {}]
  %s8 = inlined_call_operand.vmem [shape: f32[32,32], index: 8, kind: input, shape index: {}]
  %s9 = inlined_call_operand.vmem [shape: f32[1,32], index: 9, kind: input, shape index: {}]
  %s10 = inlined_call_operand.vmem [shape: f32[32,128], index: 10, kind: input, shape index: {}]
  %s11 = inlined_call_operand.vmem [shape: f32[1,128], index: 11, kind: input, shape index: {}]
  %s12 = inlined_call_operand.vmem [shape: f32[8,128], index: 12, kind: output, shape index: {}]
  %s13 = sld [smem:[#allocation0]]
  $region58: #{enhanced_quantum_lstm_forward.3} parent=0
    _
  %s15 = ssub.s32 1, %s13
  %s16 = scalar_select 0, %s15, %s13
  // Predicated region
  $region2: #{enhanced_quantum_lstm_forward.3} parent=0 // pred_check
    _
  $region3: #{enhanced_quantum_lstm_forward.3} parent=0 // pred_check_branch
    %18 = sbr.rel (0) target = $region5
  $region4: #{enhanced_quantum_lstm_forward.3} parent=0 // pred_region
    _
  $region5: #{enhanced_quantum_lstm_forward.3} parent=0 // pred_fallthru
    _
  // Predicated region
  $region6: #{enhanced_quantum_lstm_forward.3} parent=0 // pred_check
    _
  $region7: #{enhanced_quantum_lstm_forward.3} parent=0 // pred_check_branch
    %20 = sbr.rel (0) target = $region9
  $region8: #{enhanced_quantum_lstm_forward.3} parent=0 // pred_region
    _
  $region9: #{enhanced_quantum_lstm_forward.3} parent=0 // pred_fallthru
    _
  // Predicated region
  $region10: #{enhanced_quantum_lstm_forward.3} parent=0 // pred_check
    _
  $region11: #{enhanced_quantum_lstm_forward.3} parent=0 // pred_check_branch
    %22 = sbr.rel (0) target = $region13
  $region12: #{enhanced_quantum_lstm_forward.3} parent=0 // pred_region
    _
  $region13: #{enhanced_quantum_lstm_forward.3} parent=0 // pred_fallthru
    _
  // Predicated region
  $region14: #{enhanced_quantum_lstm_forward.3} parent=0 // pred_check
    _
  $region15: #{enhanced_quantum_lstm_forward.3} parent=0 // pred_check_branch
    %24 = sbr.rel (0) target = $region17
  $region16: #{enhanced_quantum_lstm_forward.3} parent=0 // pred_region
    _
  $region17: #{enhanced_quantum_lstm_forward.3} parent=0 // pred_fallthru
    _
  // Predicated region
  $region18: #{enhanced_quantum_lstm_forward.3} parent=0 // pred_check
    _
  $region19: #{enhanced_quantum_lstm_forward.3} parent=0 // pred_check_branch
    %26 = sbr.rel (0) target = $region21
  $region20: #{enhanced_quantum_lstm_forward.3} parent=0 // pred_region
    _
  $region21: #{enhanced_quantum_lstm_forward.3} parent=0 // pred_fallthru
    _
  // Predicated region
  $region22: #{enhanced_quantum_lstm_forward.3} parent=0 // pred_check
    _
  $region23: #{enhanced_quantum_lstm_forward.3} parent=0 // pred_check_branch
    %28 = sbr.rel (0) target = $region25
  $region24: #{enhanced_quantum_lstm_forward.3} parent=0 // pred_region
    _
  $region25: #{enhanced_quantum_lstm_forward.3} parent=0 // pred_fallthru
    _
  // Predicated region
  $region26: #{enhanced_quantum_lstm_forward.3} parent=0 // pred_check
    _
  $region27: #{enhanced_quantum_lstm_forward.3} parent=0 // pred_check_branch
    %30 = sbr.rel (0) target = $region29
  $region28: #{enhanced_quantum_lstm_forward.3} parent=0 // pred_region
    _
  $region29: #{enhanced_quantum_lstm_forward.3} parent=0 // pred_fallthru
    _
  // Predicated region
  $region30: #{enhanced_quantum_lstm_forward.3} parent=0 // pred_check
    _
  $region31: #{enhanced_quantum_lstm_forward.3} parent=0 // pred_check_branch
    %32 = sbr.rel (0) target = $region33
  $region32: #{enhanced_quantum_lstm_forward.3} parent=0 // pred_region
    _
  $region33: #{enhanced_quantum_lstm_forward.3} parent=0 // pred_fallthru
    _
  // Predicated region
  $region34: #{enhanced_quantum_lstm_forward.3} parent=0 // pred_check
    _
  $region35: #{enhanced_quantum_lstm_forward.3} parent=0 // pred_check_branch
    %34 = sbr.rel (0) target = $region37
  $region36: #{enhanced_quantum_lstm_forward.3} parent=0 // pred_region
    _
  $region37: #{enhanced_quantum_lstm_forward.3} parent=0 // pred_fallthru
    _
  // Predicated region
  $region38: #{enhanced_quantum_lstm_forward.3} parent=0 // pred_check
    _
  $region39: #{enhanced_quantum_lstm_forward.3} parent=0 // pred_check_branch
    %36 = sbr.rel (0) target = $region41
  $region40: #{enhanced_quantum_lstm_forward.3} parent=0 // pred_region
    _
  $region41: #{enhanced_quantum_lstm_forward.3} parent=0 // pred_fallthru
    _
  // Predicated region
  $region42: #{enhanced_quantum_lstm_forward.3} parent=0 // pred_check
    _
  $region43: #{enhanced_quantum_lstm_forward.3} parent=0 // pred_check_branch
    %38 = sbr.rel (0) target = $region45
  $region44: #{enhanced_quantum_lstm_forward.3} parent=0 // pred_region
    _
  $region45: #{enhanced_quantum_lstm_forward.3} parent=0 // pred_fallthru
    _
  // Predicated region
  $region46: #{enhanced_quantum_lstm_forward.3} parent=0 // pred_check
    _
  $region47: #{enhanced_quantum_lstm_forward.3} parent=0 // pred_check_branch
    %40 = sbr.rel (0) target = $region49
  $region48: #{enhanced_quantum_lstm_forward.3} parent=0 // pred_region
    _
  $region49: #{enhanced_quantum_lstm_forward.3} parent=0 // pred_fallthru
    _
  %v41 = vld [vmem:[%s0] sm:$0xff]
  %v42 = vld [vmem:[%s0 + $0x8] sm:$0xff]
  %v43 = vld [vmem:[%s0 + $0x10] sm:$0xff]
  %v44 = vld [vmem:[%s0 + $0x18] sm:$0xff]
  %v45 = vld [vmem:[%s0 + $0x20] sm:$0xff]
  %v46 = vld [vmem:[%s0 + $0x28] sm:$0xff]
  %v47 = vld [vmem:[%s0 + $0x30] sm:$0xff]
  %v48 = vld [vmem:[%s0 + $0x38] sm:$0xff]
  %v49 = vld [vmem:[%s1] sm:$0xf]
  %v50 = vand.u32 2147483647, %v49
  %vm51 = vcmp.le.f32.partialorder %v50, 0.7853982
  %vm52 = vcmp.lt.s32.totalorder %v49, 0
  %v53 = vand.u32 %v49, 2139095040
  %v54 = vshrl.u32 %v53, 23
  %v55 = vsub.s32 %v54, 127
  %v56 = vand.u32 2147483647, %v49
  %v57 = vand.u32 %v56, 8388607
  %v58 = vor.u32 %v57, 8388608
  %v59 = vsub.s32 0, %v58
  %v60 = vadd.s32 %v55, 1
  %vm61 = vcmp.gt.s32.totalorder %v60, 0
  %v62 = vsel %vm61, %v60, 0
  %v63 = vshrl.u32 %v62, 5
  %v64 = vand.u32 %v62, 31
  %v65 = vsub.s32 32, %v64
  %v66 = vshrl.u32 683565275, %v65
  %v67 = vshll.u32 683565275, %v64
  %v68 = vshrl.u32 2475754826, %v65
  %v69 = vor.u32 %v67, %v68
  %v70 = vshll.u32 2475754826, %v64
  %v71 = vshrl.u32 2131351028, %v65
  %v72 = vor.u32 %v70, %v71
  %v73 = vshll.u32 2131351028, %v64
  %v74 = vshrl.u32 2102212464, %v65
  %v75 = vor.u32 %v73, %v74
  %v76 = vshll.u32 2102212464, %v64
  %v77 = vshrl.u32 920167782, %v65
  %v78 = vor.u32 %v76, %v77
  %v79 = vshll.u32 920167782, %v64
  %v80 = vshrl.u32 1326507024, %v65
  %v81 = vor.u32 %v79, %v80
  %vm82 = vcmp.lt.s32.totalorder %v63, 1
  %vm83 = vcmp.lt.s32.totalorder %v63, 2
  %vm84 = vcmp.lt.s32.totalorder %v63, 3
  %vm85 = vcmp.lt.s32.totalorder %v63, 4
  %v86 = vsel %vm82, %v66, %v69
  %v87 = vsel %vm85, %v75, 2102212464
  %v88 = vsel %vm84, %v72, %v87
  %v89 = vsel %vm83, %v86, %v88
  %v90 = vsel %vm82, %v69, %v72
  %v91 = vsel %vm85, %v78, 920167782
  %v92 = vsel %vm84, %v75, %v91
  %v93 = vsel %vm83, %v90, %v92
  %v94 = vsel %vm82, %v72, %v75
  %v95 = vsel %vm85, %v81, 1326507024
  %v96 = vsel %vm84, %v78, %v95
  %v97 = vsel %vm83, %v94, %v96
  %v98 = vshll.u32 %v58, 8
  %v99 = vmul.u32.u64.compose %v98, %v97
  %v100 = vextract.low.u32 %v99
  %v101 = vextract.high.u32 %v99
  %v102 = vmul.u32.u64.compose %v98, %v93
  %v103 = vextract.low.u32 %v102
  %v104 = vextract.high.u32 %v102
  %v105 = vmul.u32 %v98, %v89
  %v106 = vadd.s32 %v101, %v103
  %vm107 = vc.u32 %v101, %v103
  %v108 = vadd.s32 %v104, 1
  %v109 = vsel %vm107, %v108, %v104
  %v110 = vadd.s32 %v105, %v109
  %v111 = vadd.s32 %v110, 536870912
  %v112 = vshrl.u32 %v111, 30
  %v113 = vshll.u32 %v112, 30
  %v114 = vsub.s32 %v110, %v113
  %vm115 = vcmp.lt.s32.totalorder %v114, 0
  %v116 = vsub.s32 0, %v114
  %v117 = vsel %vm115, %v116, %v114
  %v118 = vclz %v117
  %v119 = vsub.s32 %v118, 2
  %vm120 = vcmp.gt.s32.totalorder 0, %v119
  %v121 = vsel %vm120, 0, %v119
  %v122 = vsub.s32 32, %v121
  %v123 = vshll.u32 %v114, %v121
  %v124 = vshrl.u32 %v106, %v122
  %v125 = vor.u32 %v123, %v124
  %v126 = vsub.s32 4294967266, %v121
  %v127 = vadd.s32 %v126, 127
  %v128 = vshll.u32 %v127, 23
  %v129 = vor.u32 4788187, %v128
  %v130 = vand.u32 2147483647, %v129
  %v132 = vcvt.s32.f32 %v125
  %v133 = vmul.f32 %v132, %v130
  %v134 = vxor.u32 %v133, 2147483648
  %v135 = vsel %vm52, %v134, %v133
  %v136 = vsub.s32 4, %v112
  %v137 = vsel %vm52, %v136, %v112
  %v138 = vsel %vm51, %v49, %v135
  %v139 = vsel %vm51, 0, %v137
  %v140 = vcosq.f32.pop %v138
  %v141 = vsinq.f32.pop %v138
  %vm142 = vweird.f32 %v49
  %v143 = vand.u32 %v139, 3
  %vm144 = vcmp.lt.s32.totalorder %v143, 2
  %vm145 = vcmp.eq.s32.totalorder %v143, 0
  %v146 = vxor.u32 %v141, 2147483648
  %v147 = vsel %vm145, %v140, %v146
  %vm148 = vcmp.eq.s32.totalorder %v143, 2
  %v149 = vxor.u32 %v140, 2147483648
  %v150 = vsel %vm148, %v149, %v141
  %v151 = vsel %vm144, %v147, %v150
  %v152 = vsel %vm142, nan, %v151
  %vm153 = vcmask 31744
  %v155 = vsel %vm153, %v41, 0
  %v158 = vsel %vm153, %v42, 0
  %v161 = vsel %vm153, %v43, 0
  %v164 = vsel %vm153, %v44, 0
  %v167 = vsel %vm153, %v45, 0
  %v170 = vsel %vm153, %v46, 0
  %v173 = vsel %vm153, %v47, 0
  %v176 = vsel %vm153, %v48, 0
  %vm178 = vcmask 1043456
  %v180 = vsel %vm178, %v152, 0
  %182 = vmatprep.subr.mxu0 0.0
  %183 = vmatpush1.msra.mxu0 0.0
  %184 = vmatprep.subr.mxu0 0.0
  %185 = vmatpush1.msra.mxu0 0.0
  %186 = vmatprep.subr.mxu0 0.0
  %187 = vmatpush1.msra.mxu0 0.0
  %188 = vmatprep.subr.mxu0 0.0
  %189 = vmatpush1.msra.mxu0 0.0
  %190 = vmatprep.subr.mxu0 0.0
  %191 = vmatpush1.msra.mxu0 0.0
  %192 = vmatprep.subr.mxu0 0.0
  %193 = vmatpush1.msra.mxu0 0.0
  %194 = vmatprep.subr.mxu0 0.0
  %195 = vmatpush1.msra.mxu0 0.0
  %196 = vmatprep.subr.mxu0 0.0
  %197 = vmatpush1.msra.mxu0 0.0
  %198 = vmatprep.subr.mxu0 0.0
  %199 = vmatpush1.msra.mxu0 0.0
  %200 = vmatprep.subr.mxu0 0.0
  %201 = vmatpush1.msra.mxu0 0.0
  %202 = vmatprep.subr.mxu0 0.0
  %203 = vmatpush1.msra.mxu0 0.0
  %204 = vmatprep.subr.mxu0 0.0
  %205 = vmatpush1.msra.mxu0 0.0
  %206 = vmatprep.subr.mxu0 0.0
  %207 = vmatpush1.msra.mxu0 0.0
  %208 = vmatprep.subr.mxu0 0.0
  %209 = vmatpush1.msra.mxu0 0.0
  %210 = vmatprep.subr.mxu0 0.0
  %211 = vmatpush1.msra.mxu0 0.0
  %212 = vmatprep.subr.mxu0 0.0
  %213 = vmatpush1.msra.mxu0 %v180
  %214 = vmatprep.subr.mxu0 0.0
  %215 = vmatpush2.msra.mxu0 0.0
  %216 = vmatprep.subr.mxu0 0.0
  %217 = vmatpush2.msra.mxu0 0.0
  %218 = vmatprep.subr.mxu0 0.0
  %219 = vmatpush2.msra.mxu0 0.0
  %220 = vmatprep.subr.mxu0 0.0
  %221 = vmatpush2.msra.mxu0 0.0
  %222 = vmatprep.subr.mxu0 0.0
  %223 = vmatpush2.msra.mxu0 0.0
  %224 = vmatprep.subr.mxu0 0.0
  %225 = vmatpush2.msra.mxu0 0.0
  %226 = vmatprep.subr.mxu0 0.0
  %227 = vmatpush2.msra.mxu0 0.0
  %228 = vmatprep.subr.mxu0 0.0
  %229 = vmatpush2.msra.mxu0 0.0
  %230 = vmatprep.subr.mxu0 0.0
  %231 = vmatpush2.msra.mxu0 0.0
  %232 = vmatprep.subr.mxu0 0.0
  %233 = vmatpush2.msra.mxu0 0.0
  %234 = vmatprep.subr.mxu0 0.0
  %235 = vmatpush2.msra.mxu0 0.0
  %236 = vmatprep.subr.mxu0 0.0
  %237 = vmatpush2.msra.mxu0 0.0
  %238 = vmatprep.subr.mxu0 0.0
  %239 = vmatpush2.msra.mxu0 0.0
  %240 = vmatprep.subr.mxu0 0.0
  %241 = vmatpush2.msra.mxu0 0.0
  %242 = vmatprep.subr.mxu0 0.0
  %243 = vmatpush2.msra.mxu0 0.0
  %244 = vmatprep.subr.mxu0 0.0
  %245 = vmatpush2.msra.mxu0 0.0
  %246 = vmatprep.mubr.f32.mxu0 0.0
  %247 = vmatmul.mubr.f32.gmra.mxu0 %v155
  %v248 = vpop.f32.mrf.mxu0
  %v249 = vadd.f32 0.0, %v248
  %v250 = vpop.f32.mrf.mxu0
  %251 = vmatprep.mubr.f32.mxu0 0.0
  %252 = vmatmul.mubr.f32.gmra.mxu0 %v158
  %v253 = vpop.f32.mrf.mxu0
  %v254 = vadd.f32 0.0, %v253
  %v255 = vpop.f32.mrf.mxu0
  %256 = vmatprep.mubr.f32.mxu0 0.0
  %257 = vmatmul.mubr.f32.gmra.mxu0 %v161
  %v258 = vpop.f32.mrf.mxu0
  %v259 = vadd.f32 0.0, %v258
  %v260 = vpop.f32.mrf.mxu0
  %261 = vmatprep.mubr.f32.mxu0 0.0
  %262 = vmatmul.mubr.f32.gmra.mxu0 %v164
  %v263 = vpop.f32.mrf.mxu0
  %v264 = vadd.f32 0.0, %v263
  %v265 = vpop.f32.mrf.mxu0
  %266 = vmatprep.mubr.f32.mxu0 0.0
  %267 = vmatmul.mubr.f32.gmra.mxu0 %v167
  %v268 = vpop.f32.mrf.mxu0
  %v269 = vadd.f32 0.0, %v268
  %v270 = vpop.f32.mrf.mxu0
  %271 = vmatprep.mubr.f32.mxu0 0.0
  %272 = vmatmul.mubr.f32.gmra.mxu0 %v170
  %v273 = vpop.f32.mrf.mxu0
  %v274 = vadd.f32 0.0, %v273
  %v275 = vpop.f32.mrf.mxu0
  %276 = vmatprep.mubr.f32.mxu0 0.0
  %277 = vmatmul.mubr.f32.gmra.mxu0 %v173
  %v278 = vpop.f32.mrf.mxu0
  %v279 = vadd.f32 0.0, %v278
  %v280 = vpop.f32.mrf.mxu0
  %281 = vmatprep.mubr.f32.mxu0 0.0
  %282 = vmatmul.mubr.f32.gmra.mxu0 %v176
  %v283 = vpop.f32.mrf.mxu0
  %v284 = vadd.f32 0.0, %v283
  %v285 = vpop.f32.mrf.mxu0
  %286 = vdwg.mxu0
  %v287 = vld [vmem:[%s2] sm:$0xf]
  %v288 = vand.u32 2147483647, %v287
  %vm289 = vcmp.le.f32.partialorder %v288, 0.7853982
  %vm290 = vcmp.lt.s32.totalorder %v287, 0
  %v291 = vand.u32 %v287, 2139095040
  %v292 = vshrl.u32 %v291, 23
  %v293 = vsub.s32 %v292, 127
  %v294 = vand.u32 2147483647, %v287
  %v295 = vand.u32 %v294, 8388607
  %v296 = vor.u32 %v295, 8388608
  %v297 = vsub.s32 0, %v296
  %v298 = vadd.s32 %v293, 1
  %vm299 = vcmp.gt.s32.totalorder %v298, 0
  %v300 = vsel %vm299, %v298, 0
  %v301 = vshrl.u32 %v300, 5
  %v302 = vand.u32 %v300, 31
  %v303 = vsub.s32 32, %v302
  %v304 = vshrl.u32 683565275, %v303
  %v305 = vshll.u32 683565275, %v302
  %v306 = vshrl.u32 2475754826, %v303
  %v307 = vor.u32 %v305, %v306
  %v308 = vshll.u32 2475754826, %v302
  %v309 = vshrl.u32 2131351028, %v303
  %v310 = vor.u32 %v308, %v309
  %v311 = vshll.u32 2131351028, %v302
  %v312 = vshrl.u32 2102212464, %v303
  %v313 = vor.u32 %v311, %v312
  %v314 = vshll.u32 2102212464, %v302
  %v315 = vshrl.u32 920167782, %v303
  %v316 = vor.u32 %v314, %v315
  %v317 = vshll.u32 920167782, %v302
  %v318 = vshrl.u32 1326507024, %v303
  %v319 = vor.u32 %v317, %v318
  %vm320 = vcmp.lt.s32.totalorder %v301, 1
  %vm321 = vcmp.lt.s32.totalorder %v301, 2
  %vm322 = vcmp.lt.s32.totalorder %v301, 3
  %vm323 = vcmp.lt.s32.totalorder %v301, 4
  %v324 = vsel %vm320, %v304, %v307
  %v325 = vsel %vm323, %v313, 2102212464
  %v326 = vsel %vm322, %v310, %v325
  %v327 = vsel %vm321, %v324, %v326
  %v328 = vsel %vm320, %v307, %v310
  %v329 = vsel %vm323, %v316, 920167782
  %v330 = vsel %vm322, %v313, %v329
  %v331 = vsel %vm321, %v328, %v330
  %v332 = vsel %vm320, %v310, %v313
  %v333 = vsel %vm323, %v319, 1326507024
  %v334 = vsel %vm322, %v316, %v333
  %v335 = vsel %vm321, %v332, %v334
  %v336 = vshll.u32 %v296, 8
  %v337 = vmul.u32.u64.compose %v336, %v335
  %v338 = vextract.low.u32 %v337
  %v339 = vextract.high.u32 %v337
  %v340 = vmul.u32.u64.compose %v336, %v331
  %v341 = vextract.low.u32 %v340
  %v342 = vextract.high.u32 %v340
  %v343 = vmul.u32 %v336, %v327
  %v344 = vadd.s32 %v339, %v341
  %vm345 = vc.u32 %v339, %v341
  %v346 = vadd.s32 %v342, 1
  %v347 = vsel %vm345, %v346, %v342
  %v348 = vadd.s32 %v343, %v347
  %v349 = vadd.s32 %v348, 536870912
  %v350 = vshrl.u32 %v349, 30
  %v351 = vshll.u32 %v350, 30
  %v352 = vsub.s32 %v348, %v351
  %vm353 = vcmp.lt.s32.totalorder %v352, 0
  %v354 = vsub.s32 0, %v352
  %v355 = vsel %vm353, %v354, %v352
  %v356 = vclz %v355
  %v357 = vsub.s32 %v356, 2
  %vm358 = vcmp.gt.s32.totalorder 0, %v357
  %v359 = vsel %vm358, 0, %v357
  %v360 = vsub.s32 32, %v359
  %v361 = vshll.u32 %v352, %v359
  %v362 = vshrl.u32 %v344, %v360
  %v363 = vor.u32 %v361, %v362
  %v364 = vsub.s32 4294967266, %v359
  %v365 = vadd.s32 %v364, 127
  %v366 = vshll.u32 %v365, 23
  %v367 = vor.u32 4788187, %v366
  %v368 = vand.u32 2147483647, %v367
  %v370 = vcvt.s32.f32 %v363
  %v371 = vmul.f32 %v370, %v368
  %v372 = vxor.u32 %v371, 2147483648
  %v373 = vsel %vm290, %v372, %v371
  %v374 = vsub.s32 4, %v350
  %v375 = vsel %vm290, %v374, %v350
  %v376 = vsel %vm289, %v287, %v373
  %v377 = vsel %vm289, 0, %v375
  %v378 = vcosq.f32.pop %v376
  %v379 = vsinq.f32.pop %v376
  %vm380 = vweird.f32 %v287
  %v381 = vadd.s32 %v377, 3
  %v382 = vand.u32 %v381, 3
  %vm383 = vcmp.lt.s32.totalorder %v382, 2
  %vm384 = vcmp.eq.s32.totalorder %v382, 0
  %v385 = vxor.u32 %v379, 2147483648
  %v386 = vsel %vm384, %v378, %v385
  %vm387 = vcmp.eq.s32.totalorder %v382, 2
  %v388 = vxor.u32 %v378, 2147483648
  %v389 = vsel %vm387, %v388, %v379
  %v390 = vsel %vm383, %v386, %v389
  %v391 = vsel %vm380, nan, %v390
  %v393 = vsel %vm178, %v391, 0
  %395 = vmatprep.subr.mxu0 0.0
  %396 = vmatpush1.msra.mxu0 0.0
  %397 = vmatprep.subr.mxu0 0.0
  %398 = vmatpush1.msra.mxu0 0.0
  %399 = vmatprep.subr.mxu0 0.0
  %400 = vmatpush1.msra.mxu0 0.0
  %401 = vmatprep.subr.mxu0 0.0
  %402 = vmatpush1.msra.mxu0 0.0
  %403 = vmatprep.subr.mxu0 0.0
  %404 = vmatpush1.msra.mxu0 0.0
  %405 = vmatprep.subr.mxu0 0.0
  %406 = vmatpush1.msra.mxu0 0.0
  %407 = vmatprep.subr.mxu0 0.0
  %408 = vmatpush1.msra.mxu0 0.0
  %409 = vmatprep.subr.mxu0 0.0
  %410 = vmatpush1.msra.mxu0 0.0
  %411 = vmatprep.subr.mxu0 0.0
  %412 = vmatpush1.msra.mxu0 0.0
  %413 = vmatprep.subr.mxu0 0.0
  %414 = vmatpush1.msra.mxu0 0.0
  %415 = vmatprep.subr.mxu0 0.0
  %416 = vmatpush1.msra.mxu0 0.0
  %417 = vmatprep.subr.mxu0 0.0
  %418 = vmatpush1.msra.mxu0 0.0
  %419 = vmatprep.subr.mxu0 0.0
  %420 = vmatpush1.msra.mxu0 0.0
  %421 = vmatprep.subr.mxu0 0.0
  %422 = vmatpush1.msra.mxu0 0.0
  %423 = vmatprep.subr.mxu0 0.0
  %424 = vmatpush1.msra.mxu0 0.0
  %425 = vmatprep.subr.mxu0 0.0
  %426 = vmatpush1.msra.mxu0 %v393
  %427 = vmatprep.subr.mxu0 0.0
  %428 = vmatpush2.msra.mxu0 0.0
  %429 = vmatprep.subr.mxu0 0.0
  %430 = vmatpush2.msra.mxu0 0.0
  %431 = vmatprep.subr.mxu0 0.0
  %432 = vmatpush2.msra.mxu0 0.0
  %433 = vmatprep.subr.mxu0 0.0
  %434 = vmatpush2.msra.mxu0 0.0
  %435 = vmatprep.subr.mxu0 0.0
  %436 = vmatpush2.msra.mxu0 0.0
  %437 = vmatprep.subr.mxu0 0.0
  %438 = vmatpush2.msra.mxu0 0.0
  %439 = vmatprep.subr.mxu0 0.0
  %440 = vmatpush2.msra.mxu0 0.0
  %441 = vmatprep.subr.mxu0 0.0
  %442 = vmatpush2.msra.mxu0 0.0
  %443 = vmatprep.subr.mxu0 0.0
  %444 = vmatpush2.msra.mxu0 0.0
  %445 = vmatprep.subr.mxu0 0.0
  %446 = vmatpush2.msra.mxu0 0.0
  %447 = vmatprep.subr.mxu0 0.0
  %448 = vmatpush2.msra.mxu0 0.0
  %449 = vmatprep.subr.mxu0 0.0
  %450 = vmatpush2.msra.mxu0 0.0
  %451 = vmatprep.subr.mxu0 0.0
  %452 = vmatpush2.msra.mxu0 0.0
  %453 = vmatprep.subr.mxu0 0.0
  %454 = vmatpush2.msra.mxu0 0.0
  %455 = vmatprep.subr.mxu0 0.0
  %456 = vmatpush2.msra.mxu0 0.0
  %457 = vmatprep.subr.mxu0 0.0
  %458 = vmatpush2.msra.mxu0 0.0
  %459 = vmatprep.mubr.f32.mxu0 0.0
  %460 = vmatmul.mubr.f32.gmra.mxu0 %v155
  %v461 = vpop.f32.mrf.mxu0
  %v462 = vadd.f32 0.0, %v461
  %v463 = vpop.f32.mrf.mxu0
  %464 = vmatprep.mubr.f32.mxu0 0.0
  %465 = vmatmul.mubr.f32.gmra.mxu0 %v158
  %v466 = vpop.f32.mrf.mxu0
  %v467 = vadd.f32 0.0, %v466
  %v468 = vpop.f32.mrf.mxu0
  %469 = vmatprep.mubr.f32.mxu0 0.0
  %470 = vmatmul.mubr.f32.gmra.mxu0 %v161
  %v471 = vpop.f32.mrf.mxu0
  %v472 = vadd.f32 0.0, %v471
  %v473 = vpop.f32.mrf.mxu0
  %474 = vmatprep.mubr.f32.mxu0 0.0
  %475 = vmatmul.mubr.f32.gmra.mxu0 %v164
  %v476 = vpop.f32.mrf.mxu0
  %v477 = vadd.f32 0.0, %v476
  %v478 = vpop.f32.mrf.mxu0
  %479 = vmatprep.mubr.f32.mxu0 0.0
  %480 = vmatmul.mubr.f32.gmra.mxu0 %v167
  %v481 = vpop.f32.mrf.mxu0
  %v482 = vadd.f32 0.0, %v481
  %v483 = vpop.f32.mrf.mxu0
  %484 = vmatprep.mubr.f32.mxu0 0.0
  %485 = vmatmul.mubr.f32.gmra.mxu0 %v170
  %v486 = vpop.f32.mrf.mxu0
  %v487 = vadd.f32 0.0, %v486
  %v488 = vpop.f32.mrf.mxu0
  %489 = vmatprep.mubr.f32.mxu0 0.0
  %490 = vmatmul.mubr.f32.gmra.mxu0 %v173
  %v491 = vpop.f32.mrf.mxu0
  %v492 = vadd.f32 0.0, %v491
  %v493 = vpop.f32.mrf.mxu0
  %494 = vmatprep.mubr.f32.mxu0 0.0
  %495 = vmatmul.mubr.f32.gmra.mxu0 %v176
  %v496 = vpop.f32.mrf.mxu0
  %v497 = vadd.f32 0.0, %v496
  %v498 = vpop.f32.mrf.mxu0
  %499 = vdwg.mxu0
  %v500 = vmul.f32 %v249, %v249
  %v501 = vmul.f32 %v254, %v254
  %v502 = vmul.f32 %v259, %v259
  %v503 = vmul.f32 %v264, %v264
  %v504 = vmul.f32 %v269, %v269
  %v505 = vmul.f32 %v274, %v274
  %v506 = vmul.f32 %v279, %v279
  %v507 = vmul.f32 %v284, %v284
  %v508 = vmul.f32 %v462, %v462
  %v509 = vmul.f32 %v467, %v467
  %v510 = vmul.f32 %v472, %v472
  %v511 = vmul.f32 %v477, %v477
  %v512 = vmul.f32 %v482, %v482
  %v513 = vmul.f32 %v487, %v487
  %v514 = vmul.f32 %v492, %v492
  %v515 = vmul.f32 %v497, %v497
  %v516 = vadd.f32 %v500, %v508
  %v517 = vadd.f32 %v501, %v509
  %v518 = vadd.f32 %v502, %v510
  %v519 = vadd.f32 %v503, %v511
  %v520 = vadd.f32 %v504, %v512
  %v521 = vadd.f32 %v505, %v513
  %v522 = vadd.f32 %v506, %v514
  %v523 = vadd.f32 %v507, %v515
  %v524 = vrsqrt.pop %v516
  %v525 = vmul.f32 %v516, %v524
  %vm526 = vcmp.eq.f32.partialorder %v516, inf
  %v527 = vsel %vm526, %v516, %v525
  %vm528 = vcmp.eq.f32.partialorder %v516, 0.0
  %v529 = vand.u32 %v516, 2147483648
  %v530 = vsel %vm528, %v529, %v527
  %v531 = vrsqrt.pop %v517
  %v532 = vmul.f32 %v517, %v531
  %vm533 = vcmp.eq.f32.partialorder %v517, inf
  %v534 = vsel %vm533, %v517, %v532
  %vm535 = vcmp.eq.f32.partialorder %v517, 0.0
  %v536 = vand.u32 %v517, 2147483648
  %v537 = vsel %vm535, %v536, %v534
  %v538 = vrsqrt.pop %v518
  %v539 = vmul.f32 %v518, %v538
  %vm540 = vcmp.eq.f32.partialorder %v518, inf
  %v541 = vsel %vm540, %v518, %v539
  %vm542 = vcmp.eq.f32.partialorder %v518, 0.0
  %v543 = vand.u32 %v518, 2147483648
  %v544 = vsel %vm542, %v543, %v541
  %v545 = vrsqrt.pop %v519
  %v546 = vmul.f32 %v519, %v545
  %vm547 = vcmp.eq.f32.partialorder %v519, inf
  %v548 = vsel %vm547, %v519, %v546
  %vm549 = vcmp.eq.f32.partialorder %v519, 0.0
  %v550 = vand.u32 %v519, 2147483648
  %v551 = vsel %vm549, %v550, %v548
  %v552 = vrsqrt.pop %v520
  %v553 = vmul.f32 %v520, %v552
  %vm554 = vcmp.eq.f32.partialorder %v520, inf
  %v555 = vsel %vm554, %v520, %v553
  %vm556 = vcmp.eq.f32.partialorder %v520, 0.0
  %v557 = vand.u32 %v520, 2147483648
  %v558 = vsel %vm556, %v557, %v555
  %v559 = vrsqrt.pop %v521
  %v560 = vmul.f32 %v521, %v559
  %vm561 = vcmp.eq.f32.partialorder %v521, inf
  %v562 = vsel %vm561, %v521, %v560
  %vm563 = vcmp.eq.f32.partialorder %v521, 0.0
  %v564 = vand.u32 %v521, 2147483648
  %v565 = vsel %vm563, %v564, %v562
  %v566 = vrsqrt.pop %v522
  %v567 = vmul.f32 %v522, %v566
  %vm568 = vcmp.eq.f32.partialorder %v522, inf
  %v569 = vsel %vm568, %v522, %v567
  %vm570 = vcmp.eq.f32.partialorder %v522, 0.0
  %v571 = vand.u32 %v522, 2147483648
  %v572 = vsel %vm570, %v571, %v569
  %v573 = vrsqrt.pop %v523
  %v574 = vmul.f32 %v523, %v573
  %vm575 = vcmp.eq.f32.partialorder %v523, inf
  %v576 = vsel %vm575, %v523, %v574
  %vm577 = vcmp.eq.f32.partialorder %v523, 0.0
  %v578 = vand.u32 %v523, 2147483648
  %v579 = vsel %vm577, %v578, %v576
  %v580 = vld [vmem:[%s3] sm:$0xff]
  %v581 = vld [vmem:[%s3 + $0x8] sm:$0xff]
  %v582 = vld [vmem:[%s3 + $0x10] sm:$0xff]
  %v583 = vld [vmem:[%s3 + $0x18] sm:$0xff]
  %v584 = vld [vmem:[%s5] sm:$0x1]
  %v586 = vlaneseq
  %v587 = vshrl.u32 %v586, 7
  %v588 = vsub.s32 0, %v587
  %v589 = vrot.slane %v584, %v588
  %vm591 = vcmask 261120
  %v593 = vsel %vm591, %v530, 0
  %v596 = vsel %vm591, %v537, 0
  %v599 = vsel %vm591, %v544, 0
  %v602 = vsel %vm591, %v551, 0
  %v605 = vsel %vm591, %v558, 0
  %v608 = vsel %vm591, %v565, 0
  %v611 = vsel %vm591, %v572, 0
  %v614 = vsel %vm591, %v579, 0
  %616 = vmatprep.subr.mxu0 0.0
  %617 = vmatpush1.msra.mxu0 0.0
  %618 = vmatprep.subr.mxu0 0.0
  %619 = vmatpush1.msra.mxu0 0.0
  %620 = vmatprep.subr.mxu0 0.0
  %621 = vmatpush1.msra.mxu0 0.0
  %622 = vmatprep.subr.mxu0 0.0
  %623 = vmatpush1.msra.mxu0 0.0
  %624 = vmatprep.subr.mxu0 0.0
  %625 = vmatpush1.msra.mxu0 0.0
  %626 = vmatprep.subr.mxu0 0.0
  %627 = vmatpush1.msra.mxu0 0.0
  %628 = vmatprep.subr.mxu0 0.0
  %629 = vmatpush1.msra.mxu0 0.0
  %630 = vmatprep.subr.mxu0 0.0
  %631 = vmatpush1.msra.mxu0 0.0
  %632 = vmatprep.subr.mxu0 0.0
  %633 = vmatpush1.msra.mxu0 0.0
  %634 = vmatprep.subr.mxu0 0.0
  %635 = vmatpush1.msra.mxu0 0.0
  %636 = vmatprep.subr.mxu0 0.0
  %637 = vmatpush1.msra.mxu0 0.0
  %638 = vmatprep.subr.mxu0 0.0
  %639 = vmatpush1.msra.mxu0 0.0
  %640 = vmatprep.subr.mxu0 0.0
  %641 = vmatpush1.msra.mxu0 %v583
  %642 = vmatprep.subr.mxu0 0.0
  %643 = vmatpush1.msra.mxu0 %v582
  %644 = vmatprep.subr.mxu0 0.0
  %645 = vmatpush1.msra.mxu0 %v581
  %646 = vmatprep.subr.mxu0 0.0
  %647 = vmatpush1.msra.mxu0 %v580
  %648 = vmatprep.subr.mxu0 0.0
  %649 = vmatpush2.msra.mxu0 0.0
  %650 = vmatprep.subr.mxu0 0.0
  %651 = vmatpush2.msra.mxu0 0.0
  %652 = vmatprep.subr.mxu0 0.0
  %653 = vmatpush2.msra.mxu0 0.0
  %654 = vmatprep.subr.mxu0 0.0
  %655 = vmatpush2.msra.mxu0 0.0
  %656 = vmatprep.subr.mxu0 0.0
  %657 = vmatpush2.msra.mxu0 0.0
  %658 = vmatprep.subr.mxu0 0.0
  %659 = vmatpush2.msra.mxu0 0.0
  %660 = vmatprep.subr.mxu0 0.0
  %661 = vmatpush2.msra.mxu0 0.0
  %662 = vmatprep.subr.mxu0 0.0
  %663 = vmatpush2.msra.mxu0 0.0
  %664 = vmatprep.subr.mxu0 0.0
  %665 = vmatpush2.msra.mxu0 0.0
  %666 = vmatprep.subr.mxu0 0.0
  %667 = vmatpush2.msra.mxu0 0.0
  %668 = vmatprep.subr.mxu0 0.0
  %669 = vmatpush2.msra.mxu0 0.0
  %670 = vmatprep.subr.mxu0 0.0
  %671 = vmatpush2.msra.mxu0 0.0
  %672 = vmatprep.subr.mxu0 0.0
  %673 = vmatpush2.msra.mxu0 0.0
  %674 = vmatprep.subr.mxu0 0.0
  %675 = vmatpush2.msra.mxu0 0.0
  %676 = vmatprep.subr.mxu0 0.0
  %677 = vmatpush2.msra.mxu0 0.0
  %678 = vmatprep.subr.mxu0 0.0
  %679 = vmatpush2.msra.mxu0 0.0
  %680 = vmatprep.mubr.f32.mxu0 0.0
  %681 = vmatmul.mubr.f32.gmra.mxu0 %v593
  %v682 = vpop.f32.mrf.mxu0
  %v683 = vadd.f32 %v589, %v682
  %v684 = vpop.f32.mrf.mxu0
  %685 = vmatprep.mubr.f32.mxu0 0.0
  %686 = vmatmul.mubr.f32.gmra.mxu0 %v596
  %v687 = vpop.f32.mrf.mxu0
  %v688 = vadd.f32 %v589, %v687
  %v689 = vpop.f32.mrf.mxu0
  %690 = vmatprep.mubr.f32.mxu0 0.0
  %691 = vmatmul.mubr.f32.gmra.mxu0 %v599
  %v692 = vpop.f32.mrf.mxu0
  %v693 = vadd.f32 %v589, %v692
  %v694 = vpop.f32.mrf.mxu0
  %695 = vmatprep.mubr.f32.mxu0 0.0
  %696 = vmatmul.mubr.f32.gmra.mxu0 %v602
  %v697 = vpop.f32.mrf.mxu0
  %v698 = vadd.f32 %v589, %v697
  %v699 = vpop.f32.mrf.mxu0
  %700 = vmatprep.mubr.f32.mxu0 0.0
  %701 = vmatmul.mubr.f32.gmra.mxu0 %v605
  %v702 = vpop.f32.mrf.mxu0
  %v703 = vadd.f32 %v589, %v702
  %v704 = vpop.f32.mrf.mxu0
  %705 = vmatprep.mubr.f32.mxu0 0.0
  %706 = vmatmul.mubr.f32.gmra.mxu0 %v608
  %v707 = vpop.f32.mrf.mxu0
  %v708 = vadd.f32 %v589, %v707
  %v709 = vpop.f32.mrf.mxu0
  %710 = vmatprep.mubr.f32.mxu0 0.0
  %711 = vmatmul.mubr.f32.gmra.mxu0 %v611
  %v712 = vpop.f32.mrf.mxu0
  %v713 = vadd.f32 %v589, %v712
  %v714 = vpop.f32.mrf.mxu0
  %715 = vmatprep.mubr.f32.mxu0 0.0
  %716 = vmatmul.mubr.f32.gmra.mxu0 %v614
  %v717 = vpop.f32.mrf.mxu0
  %v718 = vadd.f32 %v589, %v717
  %v719 = vpop.f32.mrf.mxu0
  %720 = vdwg.mxu0
  %v721 = vld [vmem:[%s4] sm:$0xff]
  %v722 = vld [vmem:[%s4 + $0x8] sm:$0xff]
  %v723 = vld [vmem:[%s4 + $0x10] sm:$0xff]
  %v724 = vld [vmem:[%s4 + $0x18] sm:$0xff]
  %v725 = vld [vmem:[%s6] sm:$0xff]
  %v726 = vld [vmem:[%s6 + $0x8] sm:$0xff]
  %v727 = vld [vmem:[%s6 + $0x10] sm:$0xff]
  %v728 = vld [vmem:[%s6 + $0x18] sm:$0xff]
  %v729 = vld [vmem:[%s6 + $0x20] sm:$0xff]
  %v730 = vld [vmem:[%s6 + $0x28] sm:$0xff]
  %v731 = vld [vmem:[%s6 + $0x30] sm:$0xff]
  %v732 = vld [vmem:[%s6 + $0x38] sm:$0xff]
  %v733 = vld [vmem:[%s7] sm:$0x1]
  %v735 = vsel %vm591, 0.0, 0
  %737 = vmatprep.subr.mxu0 0.0
  %738 = vmatpush1.msra.mxu0 0.0
  %739 = vmatprep.subr.mxu0 0.0
  %740 = vmatpush1.msra.mxu0 0.0
  %741 = vmatprep.subr.mxu0 0.0
  %742 = vmatpush1.msra.mxu0 0.0
  %743 = vmatprep.subr.mxu0 0.0
  %744 = vmatpush1.msra.mxu0 0.0
  %745 = vmatprep.subr.mxu0 0.0
  %746 = vmatpush1.msra.mxu0 0.0
  %747 = vmatprep.subr.mxu0 0.0
  %748 = vmatpush1.msra.mxu0 0.0
  %749 = vmatprep.subr.mxu0 0.0
  %750 = vmatpush1.msra.mxu0 0.0
  %751 = vmatprep.subr.mxu0 0.0
  %752 = vmatpush1.msra.mxu0 0.0
  %753 = vmatprep.subr.mxu0 0.0
  %754 = vmatpush1.msra.mxu0 0.0
  %755 = vmatprep.subr.mxu0 0.0
  %756 = vmatpush1.msra.mxu0 0.0
  %757 = vmatprep.subr.mxu0 0.0
  %758 = vmatpush1.msra.mxu0 0.0
  %759 = vmatprep.subr.mxu0 0.0
  %760 = vmatpush1.msra.mxu0 0.0
  %761 = vmatprep.subr.mxu0 0.0
  %762 = vmatpush1.msra.mxu0 %v724
  %763 = vmatprep.subr.mxu0 0.0
  %764 = vmatpush1.msra.mxu0 %v723
  %765 = vmatprep.subr.mxu0 0.0
  %766 = vmatpush1.msra.mxu0 %v722
  %767 = vmatprep.subr.mxu0 0.0
  %768 = vmatpush1.msra.mxu0 %v721
  %769 = vmatprep.subr.mxu0 0.0
  %770 = vmatpush2.msra.mxu0 0.0
  %771 = vmatprep.subr.mxu0 0.0
  %772 = vmatpush2.msra.mxu0 0.0
  %773 = vmatprep.subr.mxu0 0.0
  %774 = vmatpush2.msra.mxu0 0.0
  %775 = vmatprep.subr.mxu0 0.0
  %776 = vmatpush2.msra.mxu0 0.0
  %777 = vmatprep.subr.mxu0 0.0
  %778 = vmatpush2.msra.mxu0 0.0
  %779 = vmatprep.subr.mxu0 0.0
  %780 = vmatpush2.msra.mxu0 0.0
  %781 = vmatprep.subr.mxu0 0.0
  %782 = vmatpush2.msra.mxu0 0.0
  %783 = vmatprep.subr.mxu0 0.0
  %784 = vmatpush2.msra.mxu0 0.0
  %785 = vmatprep.subr.mxu0 0.0
  %786 = vmatpush2.msra.mxu0 0.0
  %787 = vmatprep.subr.mxu0 0.0
  %788 = vmatpush2.msra.mxu0 0.0
  %789 = vmatprep.subr.mxu0 0.0
  %790 = vmatpush2.msra.mxu0 0.0
  %791 = vmatprep.subr.mxu0 0.0
  %792 = vmatpush2.msra.mxu0 0.0
  %793 = vmatprep.subr.mxu0 0.0
  %794 = vmatpush2.msra.mxu0 0.0
  %795 = vmatprep.subr.mxu0 0.0
  %796 = vmatpush2.msra.mxu0 0.0
  %797 = vmatprep.subr.mxu0 0.0
  %798 = vmatpush2.msra.mxu0 0.0
  %799 = vmatprep.subr.mxu0 0.0
  %800 = vmatpush2.msra.mxu0 0.0
  %801 = vmatprep.mubr.f32.mxu0 0.0
  %802 = vmatmul.mubr.f32.gmra.mxu0 %v735
  %v803 = vpop.f32.mrf.mxu0
  %v804 = vadd.f32 0.0, %v803
  %v805 = vpop.f32.mrf.mxu0
  %806 = vdwg.mxu0
  %v807 = vadd.f32 %v683, %v804
  %v808 = vxor.u32 %v807, 2147483648
  %v809 = vmul.f32 %v808, 1.442695
  %v810 = vpow.pop %v809
  %v811 = vadd.f32 %v810, 1.0
  %v812 = vrcp.pop %v811
  %v813 = vmul.f32 1.0, %v812
  %v814 = vtanh.pop %v807
  %v815 = vmul.f32 %v813, 0.0
  %817 = vrot.lane.b32.xlu0 %v814, 64
  %v818 = vpop.permute.xlu0 %817
  %v820 = vmul.f32 %v813, %v818
  %822 = vrot.lane.b32.xlu0 %v820, 32
  %v823 = vpop.permute.xlu0 %822
  %v825 = vadd.f32 %v815, %v823
  %v826 = vtanh.pop %v825
  %828 = vrot.lane.b32.xlu0 %v826, 64
  %v829 = vpop.permute.xlu0 %828
  %v831 = vmul.f32 %v813, %v829
  %833 = vrot.lane.b32.xlu0 %v831, 32
  %v834 = vpop.permute.xlu0 %833
  %v835 = vsel %vm591, %v834, 0
  %837 = vmatprep.subr.mxu0 0.0
  %838 = vmatpush1.msra.mxu0 0.0
  %839 = vmatprep.subr.mxu0 0.0
  %840 = vmatpush1.msra.mxu0 0.0
  %841 = vmatprep.subr.mxu0 0.0
  %842 = vmatpush1.msra.mxu0 0.0
  %843 = vmatprep.subr.mxu0 0.0
  %844 = vmatpush1.msra.mxu0 0.0
  %845 = vmatprep.subr.mxu0 0.0
  %846 = vmatpush1.msra.mxu0 0.0
  %847 = vmatprep.subr.mxu0 0.0
  %848 = vmatpush1.msra.mxu0 0.0
  %849 = vmatprep.subr.mxu0 0.0
  %850 = vmatpush1.msra.mxu0 0.0
  %851 = vmatprep.subr.mxu0 0.0
  %852 = vmatpush1.msra.mxu0 0.0
  %853 = vmatprep.subr.mxu0 0.0
  %854 = vmatpush1.msra.mxu0 0.0
  %855 = vmatprep.subr.mxu0 0.0
  %856 = vmatpush1.msra.mxu0 0.0
  %857 = vmatprep.subr.mxu0 0.0
  %858 = vmatpush1.msra.mxu0 0.0
  %859 = vmatprep.subr.mxu0 0.0
  %860 = vmatpush1.msra.mxu0 0.0
  %861 = vmatprep.subr.mxu0 0.0
  %862 = vmatpush1.msra.mxu0 %v724
  %863 = vmatprep.subr.mxu0 0.0
  %864 = vmatpush1.msra.mxu0 %v723
  %865 = vmatprep.subr.mxu0 0.0
  %866 = vmatpush1.msra.mxu0 %v722
  %867 = vmatprep.subr.mxu0 0.0
  %868 = vmatpush1.msra.mxu0 %v721
  %869 = vmatprep.subr.mxu0 0.0
  %870 = vmatpush2.msra.mxu0 0.0
  %871 = vmatprep.subr.mxu0 0.0
  %872 = vmatpush2.msra.mxu0 0.0
  %873 = vmatprep.subr.mxu0 0.0
  %874 = vmatpush2.msra.mxu0 0.0
  %875 = vmatprep.subr.mxu0 0.0
  %876 = vmatpush2.msra.mxu0 0.0
  %877 = vmatprep.subr.mxu0 0.0
  %878 = vmatpush2.msra.mxu0 0.0
  %879 = vmatprep.subr.mxu0 0.0
  %880 = vmatpush2.msra.mxu0 0.0
  %881 = vmatprep.subr.mxu0 0.0
  %882 = vmatpush2.msra.mxu0 0.0
  %883 = vmatprep.subr.mxu0 0.0
  %884 = vmatpush2.msra.mxu0 0.0
  %885 = vmatprep.subr.mxu0 0.0
  %886 = vmatpush2.msra.mxu0 0.0
  %887 = vmatprep.subr.mxu0 0.0
  %888 = vmatpush2.msra.mxu0 0.0
  %889 = vmatprep.subr.mxu0 0.0
  %890 = vmatpush2.msra.mxu0 0.0
  %891 = vmatprep.subr.mxu0 0.0
  %892 = vmatpush2.msra.mxu0 0.0
  %893 = vmatprep.subr.mxu0 0.0
  %894 = vmatpush2.msra.mxu0 0.0
  %895 = vmatprep.subr.mxu0 0.0
  %896 = vmatpush2.msra.mxu0 0.0
  %897 = vmatprep.subr.mxu0 0.0
  %898 = vmatpush2.msra.mxu0 0.0
  %899 = vmatprep.subr.mxu0 0.0
  %900 = vmatpush2.msra.mxu0 0.0
  %901 = vmatprep.mubr.f32.mxu0 0.0
  %902 = vmatmul.mubr.f32.gmra.mxu0 %v835
  %v903 = vpop.f32.mrf.mxu0
  %v904 = vadd.f32 0.0, %v903
  %v905 = vpop.f32.mrf.mxu0
  %906 = vdwg.mxu0
  %v907 = vadd.f32 %v688, %v904
  %v908 = vxor.u32 %v907, 2147483648
  %v909 = vmul.f32 %v908, 1.442695
  %v910 = vpow.pop %v909
  %v911 = vadd.f32 %v910, 1.0
  %v912 = vrcp.pop %v911
  %v913 = vmul.f32 1.0, %v912
  %v914 = vtanh.pop %v907
  %v915 = vmul.f32 %v913, %v825
  %917 = vrot.lane.b32.xlu0 %v914, 64
  %v918 = vpop.permute.xlu0 %917
  %v920 = vmul.f32 %v913, %v918
  %922 = vrot.lane.b32.xlu0 %v920, 32
  %v923 = vpop.permute.xlu0 %922
  %v925 = vadd.f32 %v915, %v923
  %v926 = vtanh.pop %v925
  %928 = vrot.lane.b32.xlu0 %v926, 64
  %v929 = vpop.permute.xlu0 %928
  %v931 = vmul.f32 %v913, %v929
  %v933 = vsel %vm591, %v834, 0.0
  %v935 = vlaneseq
  %v936 = vshrl.u32 %v935, 7
  %v937 = vsub.s32 0, %v936
  %v938 = vrot.slane %v733, %v937
  %vm940 = vcmask 523264
  %v942 = vsel %vm940, %v933, 0
  %944 = vmatprep.subr.mxu0 0.0
  %945 = vmatpush1.msra.mxu0 0.0
  %946 = vmatprep.subr.mxu0 0.0
  %947 = vmatpush1.msra.mxu0 0.0
  %948 = vmatprep.subr.mxu0 0.0
  %949 = vmatpush1.msra.mxu0 0.0
  %950 = vmatprep.subr.mxu0 0.0
  %951 = vmatpush1.msra.mxu0 0.0
  %952 = vmatprep.subr.mxu0 0.0
  %953 = vmatpush1.msra.mxu0 0.0
  %954 = vmatprep.subr.mxu0 0.0
  %955 = vmatpush1.msra.mxu0 0.0
  %956 = vmatprep.subr.mxu0 0.0
  %957 = vmatpush1.msra.mxu0 0.0
  %958 = vmatprep.subr.mxu0 0.0
  %959 = vmatpush1.msra.mxu0 0.0
  %960 = vmatprep.subr.mxu0 0.0
  %961 = vmatpush1.msra.mxu0 %v732
  %962 = vmatprep.subr.mxu0 0.0
  %963 = vmatpush1.msra.mxu0 %v731
  %964 = vmatprep.subr.mxu0 0.0
  %965 = vmatpush1.msra.mxu0 %v730
  %966 = vmatprep.subr.mxu0 0.0
  %967 = vmatpush1.msra.mxu0 %v729
  %968 = vmatprep.subr.mxu0 0.0
  %969 = vmatpush1.msra.mxu0 %v728
  %970 = vmatprep.subr.mxu0 0.0
  %971 = vmatpush1.msra.mxu0 %v727
  %972 = vmatprep.subr.mxu0 0.0
  %973 = vmatpush1.msra.mxu0 %v726
  %974 = vmatprep.subr.mxu0 0.0
  %975 = vmatpush1.msra.mxu0 %v725
  %976 = vmatprep.subr.mxu0 0.0
  %977 = vmatpush2.msra.mxu0 0.0
  %978 = vmatprep.subr.mxu0 0.0
  %979 = vmatpush2.msra.mxu0 0.0
  %980 = vmatprep.subr.mxu0 0.0
  %981 = vmatpush2.msra.mxu0 0.0
  %982 = vmatprep.subr.mxu0 0.0
  %983 = vmatpush2.msra.mxu0 0.0
  %984 = vmatprep.subr.mxu0 0.0
  %985 = vmatpush2.msra.mxu0 0.0
  %986 = vmatprep.subr.mxu0 0.0
  %987 = vmatpush2.msra.mxu0 0.0
  %988 = vmatprep.subr.mxu0 0.0
  %989 = vmatpush2.msra.mxu0 0.0
  %990 = vmatprep.subr.mxu0 0.0
  %991 = vmatpush2.msra.mxu0 0.0
  %992 = vmatprep.subr.mxu0 0.0
  %993 = vmatpush2.msra.mxu0 0.0
  %994 = vmatprep.subr.mxu0 0.0
  %995 = vmatpush2.msra.mxu0 0.0
  %996 = vmatprep.subr.mxu0 0.0
  %997 = vmatpush2.msra.mxu0 0.0
  %998 = vmatprep.subr.mxu0 0.0
  %999 = vmatpush2.msra.mxu0 0.0
  %1000 = vmatprep.subr.mxu0 0.0
  %1001 = vmatpush2.msra.mxu0 0.0
  %1002 = vmatprep.subr.mxu0 0.0
  %1003 = vmatpush2.msra.mxu0 0.0
  %1004 = vmatprep.subr.mxu0 0.0
  %1005 = vmatpush2.msra.mxu0 0.0
  %1006 = vmatprep.subr.mxu0 0.0
  %1007 = vmatpush2.msra.mxu0 0.0
  %1008 = vmatprep.mubr.f32.mxu0 0.0
  %1009 = vmatmul.mubr.f32.gmra.mxu0 %v942
  %v1010 = vpop.f32.mrf.mxu0
  %v1011 = vadd.f32 %v938, %v1010
  %v1012 = vpop.f32.mrf.mxu0
  %1013 = vdwg.mxu0
  %v1014 = vxor.u32 %v1011, 2147483648
  %v1015 = vmul.f32 %v1014, 1.442695
  %v1016 = vpow.pop %v1015
  %v1017 = vadd.f32 %v1016, 1.0
  %v1018 = vrcp.pop %v1017
  %v1019 = vmul.f32 1.0, %v1018
  %v1020 = vtanh.pop %v1011
  %v1021 = vmul.f32 %v1019, 0.0
  %1023 = vrot.lane.b32.xlu0 %v1020, 64
  %v1024 = vpop.permute.xlu0 %1023
  %v1026 = vmul.f32 %v1019, %v1024
  %1028 = vrot.lane.b32.xlu0 %v1026, 32
  %v1029 = vpop.permute.xlu0 %1028
  %v1031 = vadd.f32 %v1021, %v1029
  %v1032 = vtanh.pop %v1031
  %1034 = vrot.lane.b32.xlu0 %v1032, 64
  %v1035 = vpop.permute.xlu0 %1034
  %v1037 = vmul.f32 %v1019, %v1035
  %1039 = vrot.lane.b32.xlu0 %v931, 32
  %v1040 = vpop.permute.xlu0 %1039
  %v1041 = vsel %vm591, %v1040, 0
  %1043 = vmatprep.subr.mxu0 0.0
  %1044 = vmatpush1.msra.mxu0 0.0
  %1045 = vmatprep.subr.mxu0 0.0
  %1046 = vmatpush1.msra.mxu0 0.0
  %1047 = vmatprep.subr.mxu0 0.0
  %1048 = vmatpush1.msra.mxu0 0.0
  %1049 = vmatprep.subr.mxu0 0.0
  %1050 = vmatpush1.msra.mxu0 0.0
  %1051 = vmatprep.subr.mxu0 0.0
  %1052 = vmatpush1.msra.mxu0 0.0
  %1053 = vmatprep.subr.mxu0 0.0
  %1054 = vmatpush1.msra.mxu0 0.0
  %1055 = vmatprep.subr.mxu0 0.0
  %1056 = vmatpush1.msra.mxu0 0.0
  %1057 = vmatprep.subr.mxu0 0.0
  %1058 = vmatpush1.msra.mxu0 0.0
  %1059 = vmatprep.subr.mxu0 0.0
  %1060 = vmatpush1.msra.mxu0 0.0
  %1061 = vmatprep.subr.mxu0 0.0
  %1062 = vmatpush1.msra.mxu0 0.0
  %1063 = vmatprep.subr.mxu0 0.0
  %1064 = vmatpush1.msra.mxu0 0.0
  %1065 = vmatprep.subr.mxu0 0.0
  %1066 = vmatpush1.msra.mxu0 0.0
  %1067 = vmatprep.subr.mxu0 0.0
  %1068 = vmatpush1.msra.mxu0 %v724
  %1069 = vmatprep.subr.mxu0 0.0
  %1070 = vmatpush1.msra.mxu0 %v723
  %1071 = vmatprep.subr.mxu0 0.0
  %1072 = vmatpush1.msra.mxu0 %v722
  %1073 = vmatprep.subr.mxu0 0.0
  %1074 = vmatpush1.msra.mxu0 %v721
  %1075 = vmatprep.subr.mxu0 0.0
  %1076 = vmatpush2.msra.mxu0 0.0
  %1077 = vmatprep.subr.mxu0 0.0
  %1078 = vmatpush2.msra.mxu0 0.0
  %1079 = vmatprep.subr.mxu0 0.0
  %1080 = vmatpush2.msra.mxu0 0.0
  %1081 = vmatprep.subr.mxu0 0.0
  %1082 = vmatpush2.msra.mxu0 0.0
  %1083 = vmatprep.subr.mxu0 0.0
  %1084 = vmatpush2.msra.mxu0 0.0
  %1085 = vmatprep.subr.mxu0 0.0
  %1086 = vmatpush2.msra.mxu0 0.0
  %1087 = vmatprep.subr.mxu0 0.0
  %1088 = vmatpush2.msra.mxu0 0.0
  %1089 = vmatprep.subr.mxu0 0.0
  %1090 = vmatpush2.msra.mxu0 0.0
  %1091 = vmatprep.subr.mxu0 0.0
  %1092 = vmatpush2.msra.mxu0 0.0
  %1093 = vmatprep.subr.mxu0 0.0
  %1094 = vmatpush2.msra.mxu0 0.0
  %1095 = vmatprep.subr.mxu0 0.0
  %1096 = vmatpush2.msra.mxu0 0.0
  %1097 = vmatprep.subr.mxu0 0.0
  %1098 = vmatpush2.msra.mxu0 0.0
  %1099 = vmatprep.subr.mxu0 0.0
  %1100 = vmatpush2.msra.mxu0 0.0
  %1101 = vmatprep.subr.mxu0 0.0
  %1102 = vmatpush2.msra.mxu0 0.0
  %1103 = vmatprep.subr.mxu0 0.0
  %1104 = vmatpush2.msra.mxu0 0.0
  %1105 = vmatprep.subr.mxu0 0.0
  %1106 = vmatpush2.msra.mxu0 0.0
  %1107 = vmatprep.mubr.f32.mxu0 0.0
  %1108 = vmatmul.mubr.f32.gmra.mxu0 %v1041
  %v1109 = vpop.f32.mrf.mxu0
  %v1110 = vadd.f32 0.0, %v1109
  %v1111 = vpop.f32.mrf.mxu0
  %1112 = vdwg.mxu0
  %v1113 = vadd.f32 %v693, %v1110
  %v1114 = vxor.u32 %v1113, 2147483648
  %v1115 = vmul.f32 %v1114, 1.442695
  %v1116 = vpow.pop %v1115
  %v1117 = vadd.f32 %v1116, 1.0
  %v1118 = vrcp.pop %v1117
  %v1119 = vmul.f32 1.0, %v1118
  %v1120 = vtanh.pop %v1113
  %v1121 = vmul.f32 %v1119, %v925
  %1123 = vrot.lane.b32.xlu0 %v1120, 64
  %v1124 = vpop.permute.xlu0 %1123
  %v1126 = vmul.f32 %v1119, %v1124
  %1128 = vrot.lane.b32.xlu0 %v1126, 32
  %v1129 = vpop.permute.xlu0 %1128
  %v1131 = vadd.f32 %v1121, %v1129
  %v1132 = vtanh.pop %v1131
  %1134 = vrot.lane.b32.xlu0 %v1132, 64
  %v1135 = vpop.permute.xlu0 %1134
  %v1137 = vmul.f32 %v1119, %v1135
  %1140 = vrot.lane.b32.xlu0 %v1037, 64
  %v1141 = vpop.permute.xlu0 %1140
  %v1143 = vsel %vm591, %v1040, %v1141
  %v1145 = vsel %vm940, %v1143, 0
  %1147 = vmatprep.subr.mxu0 0.0
  %1148 = vmatpush1.msra.mxu0 0.0
  %1149 = vmatprep.subr.mxu0 0.0
  %1150 = vmatpush1.msra.mxu0 0.0
  %1151 = vmatprep.subr.mxu0 0.0
  %1152 = vmatpush1.msra.mxu0 0.0
  %1153 = vmatprep.subr.mxu0 0.0
  %1154 = vmatpush1.msra.mxu0 0.0
  %1155 = vmatprep.subr.mxu0 0.0
  %1156 = vmatpush1.msra.mxu0 0.0
  %1157 = vmatprep.subr.mxu0 0.0
  %1158 = vmatpush1.msra.mxu0 0.0
  %1159 = vmatprep.subr.mxu0 0.0
  %1160 = vmatpush1.msra.mxu0 0.0
  %1161 = vmatprep.subr.mxu0 0.0
  %1162 = vmatpush1.msra.mxu0 0.0
  %1163 = vmatprep.subr.mxu0 0.0
  %1164 = vmatpush1.msra.mxu0 %v732
  %1165 = vmatprep.subr.mxu0 0.0
  %1166 = vmatpush1.msra.mxu0 %v731
  %1167 = vmatprep.subr.mxu0 0.0
  %1168 = vmatpush1.msra.mxu0 %v730
  %1169 = vmatprep.subr.mxu0 0.0
  %1170 = vmatpush1.msra.mxu0 %v729
  %1171 = vmatprep.subr.mxu0 0.0
  %1172 = vmatpush1.msra.mxu0 %v728
  %1173 = vmatprep.subr.mxu0 0.0
  %1174 = vmatpush1.msra.mxu0 %v727
  %1175 = vmatprep.subr.mxu0 0.0
  %1176 = vmatpush1.msra.mxu0 %v726
  %1177 = vmatprep.subr.mxu0 0.0
  %1178 = vmatpush1.msra.mxu0 %v725
  %1179 = vmatprep.subr.mxu0 0.0
  %1180 = vmatpush2.msra.mxu0 0.0
  %1181 = vmatprep.subr.mxu0 0.0
  %1182 = vmatpush2.msra.mxu0 0.0
  %1183 = vmatprep.subr.mxu0 0.0
  %1184 = vmatpush2.msra.mxu0 0.0
  %1185 = vmatprep.subr.mxu0 0.0
  %1186 = vmatpush2.msra.mxu0 0.0
  %1187 = vmatprep.subr.mxu0 0.0
  %1188 = vmatpush2.msra.mxu0 0.0
  %1189 = vmatprep.subr.mxu0 0.0
  %1190 = vmatpush2.msra.mxu0 0.0
  %1191 = vmatprep.subr.mxu0 0.0
  %1192 = vmatpush2.msra.mxu0 0.0
  %1193 = vmatprep.subr.mxu0 0.0
  %1194 = vmatpush2.msra.mxu0 0.0
  %1195 = vmatprep.subr.mxu0 0.0
  %1196 = vmatpush2.msra.mxu0 0.0
  %1197 = vmatprep.subr.mxu0 0.0
  %1198 = vmatpush2.msra.mxu0 0.0
  %1199 = vmatprep.subr.mxu0 0.0
  %1200 = vmatpush2.msra.mxu0 0.0
  %1201 = vmatprep.subr.mxu0 0.0
  %1202 = vmatpush2.msra.mxu0 0.0
  %1203 = vmatprep.subr.mxu0 0.0
  %1204 = vmatpush2.msra.mxu0 0.0
  %1205 = vmatprep.subr.mxu0 0.0
  %1206 = vmatpush2.msra.mxu0 0.0
  %1207 = vmatprep.subr.mxu0 0.0
  %1208 = vmatpush2.msra.mxu0 0.0
  %1209 = vmatprep.subr.mxu0 0.0
  %1210 = vmatpush2.msra.mxu0 0.0
  %1211 = vmatprep.mubr.f32.mxu0 0.0
  %1212 = vmatmul.mubr.f32.gmra.mxu0 %v1145
  %v1213 = vpop.f32.mrf.mxu0
  %v1214 = vadd.f32 %v938, %v1213
  %v1215 = vpop.f32.mrf.mxu0
  %1216 = vdwg.mxu0
  %v1217 = vxor.u32 %v1214, 2147483648
  %v1218 = vmul.f32 %v1217, 1.442695
  %v1219 = vpow.pop %v1218
  %v1220 = vadd.f32 %v1219, 1.0
  %v1221 = vrcp.pop %v1220
  %v1222 = vmul.f32 1.0, %v1221
  %v1223 = vtanh.pop %v1214
  %v1224 = vmul.f32 %v1222, %v1031
  %1226 = vrot.lane.b32.xlu0 %v1223, 64
  %v1227 = vpop.permute.xlu0 %1226
  %v1229 = vmul.f32 %v1222, %v1227
  %1231 = vrot.lane.b32.xlu0 %v1229, 32
  %v1232 = vpop.permute.xlu0 %1231
  %v1234 = vadd.f32 %v1224, %v1232
  %v1235 = vtanh.pop %v1234
  %1237 = vrot.lane.b32.xlu0 %v1235, 64
  %v1238 = vpop.permute.xlu0 %1237
  %v1240 = vmul.f32 %v1222, %v1238
  %1242 = vrot.lane.b32.xlu0 %v1137, 32
  %v1243 = vpop.permute.xlu0 %1242
  %v1244 = vsel %vm591, %v1243, 0
  %1246 = vmatprep.subr.mxu0 0.0
  %1247 = vmatpush1.msra.mxu0 0.0
  %1248 = vmatprep.subr.mxu0 0.0
  %1249 = vmatpush1.msra.mxu0 0.0
  %1250 = vmatprep.subr.mxu0 0.0
  %1251 = vmatpush1.msra.mxu0 0.0
  %1252 = vmatprep.subr.mxu0 0.0
  %1253 = vmatpush1.msra.mxu0 0.0
  %1254 = vmatprep.subr.mxu0 0.0
  %1255 = vmatpush1.msra.mxu0 0.0
  %1256 = vmatprep.subr.mxu0 0.0
  %1257 = vmatpush1.msra.mxu0 0.0
  %1258 = vmatprep.subr.mxu0 0.0
  %1259 = vmatpush1.msra.mxu0 0.0
  %1260 = vmatprep.subr.mxu0 0.0
  %1261 = vmatpush1.msra.mxu0 0.0
  %1262 = vmatprep.subr.mxu0 0.0
  %1263 = vmatpush1.msra.mxu0 0.0
  %1264 = vmatprep.subr.mxu0 0.0
  %1265 = vmatpush1.msra.mxu0 0.0
  %1266 = vmatprep.subr.mxu0 0.0
  %1267 = vmatpush1.msra.mxu0 0.0
  %1268 = vmatprep.subr.mxu0 0.0
  %1269 = vmatpush1.msra.mxu0 0.0
  %1270 = vmatprep.subr.mxu0 0.0
  %1271 = vmatpush1.msra.mxu0 %v724
  %1272 = vmatprep.subr.mxu0 0.0
  %1273 = vmatpush1.msra.mxu0 %v723
  %1274 = vmatprep.subr.mxu0 0.0
  %1275 = vmatpush1.msra.mxu0 %v722
  %1276 = vmatprep.subr.mxu0 0.0
  %1277 = vmatpush1.msra.mxu0 %v721
  %1278 = vmatprep.subr.mxu0 0.0
  %1279 = vmatpush2.msra.mxu0 0.0
  %1280 = vmatprep.subr.mxu0 0.0
  %1281 = vmatpush2.msra.mxu0 0.0
  %1282 = vmatprep.subr.mxu0 0.0
  %1283 = vmatpush2.msra.mxu0 0.0
  %1284 = vmatprep.subr.mxu0 0.0
  %1285 = vmatpush2.msra.mxu0 0.0
  %1286 = vmatprep.subr.mxu0 0.0
  %1287 = vmatpush2.msra.mxu0 0.0
  %1288 = vmatprep.subr.mxu0 0.0
  %1289 = vmatpush2.msra.mxu0 0.0
  %1290 = vmatprep.subr.mxu0 0.0
  %1291 = vmatpush2.msra.mxu0 0.0
  %1292 = vmatprep.subr.mxu0 0.0
  %1293 = vmatpush2.msra.mxu0 0.0
  %1294 = vmatprep.subr.mxu0 0.0
  %1295 = vmatpush2.msra.mxu0 0.0
  %1296 = vmatprep.subr.mxu0 0.0
  %1297 = vmatpush2.msra.mxu0 0.0
  %1298 = vmatprep.subr.mxu0 0.0
  %1299 = vmatpush2.msra.mxu0 0.0
  %1300 = vmatprep.subr.mxu0 0.0
  %1301 = vmatpush2.msra.mxu0 0.0
  %1302 = vmatprep.subr.mxu0 0.0
  %1303 = vmatpush2.msra.mxu0 0.0
  %1304 = vmatprep.subr.mxu0 0.0
  %1305 = vmatpush2.msra.mxu0 0.0
  %1306 = vmatprep.subr.mxu0 0.0
  %1307 = vmatpush2.msra.mxu0 0.0
  %1308 = vmatprep.subr.mxu0 0.0
  %1309 = vmatpush2.msra.mxu0 0.0
  %1310 = vmatprep.mubr.f32.mxu0 0.0
  %1311 = vmatmul.mubr.f32.gmra.mxu0 %v1244
  %v1312 = vpop.f32.mrf.mxu0
  %v1313 = vadd.f32 0.0, %v1312
  %v1314 = vpop.f32.mrf.mxu0
  %1315 = vdwg.mxu0
  %v1316 = vadd.f32 %v698, %v1313
  %v1317 = vxor.u32 %v1316, 2147483648
  %v1318 = vmul.f32 %v1317, 1.442695
  %v1319 = vpow.pop %v1318
  %v1320 = vadd.f32 %v1319, 1.0
  %v1321 = vrcp.pop %v1320
  %v1322 = vmul.f32 1.0, %v1321
  %v1323 = vtanh.pop %v1316
  %v1324 = vmul.f32 %v1322, %v1131
  %1326 = vrot.lane.b32.xlu0 %v1323, 64
  %v1327 = vpop.permute.xlu0 %1326
  %v1329 = vmul.f32 %v1322, %v1327
  %1331 = vrot.lane.b32.xlu0 %v1329, 32
  %v1332 = vpop.permute.xlu0 %1331
  %v1334 = vadd.f32 %v1324, %v1332
  %v1335 = vtanh.pop %v1334
  %1337 = vrot.lane.b32.xlu0 %v1335, 64
  %v1338 = vpop.permute.xlu0 %1337
  %v1340 = vmul.f32 %v1322, %v1338
  %1343 = vrot.lane.b32.xlu0 %v1240, 64
  %v1344 = vpop.permute.xlu0 %1343
  %v1346 = vsel %vm591, %v1243, %v1344
  %v1348 = vsel %vm940, %v1346, 0
  %1350 = vmatprep.subr.mxu0 0.0
  %1351 = vmatpush1.msra.mxu0 0.0
  %1352 = vmatprep.subr.mxu0 0.0
  %1353 = vmatpush1.msra.mxu0 0.0
  %1354 = vmatprep.subr.mxu0 0.0
  %1355 = vmatpush1.msra.mxu0 0.0
  %1356 = vmatprep.subr.mxu0 0.0
  %1357 = vmatpush1.msra.mxu0 0.0
  %1358 = vmatprep.subr.mxu0 0.0
  %1359 = vmatpush1.msra.mxu0 0.0
  %1360 = vmatprep.subr.mxu0 0.0
  %1361 = vmatpush1.msra.mxu0 0.0
  %1362 = vmatprep.subr.mxu0 0.0
  %1363 = vmatpush1.msra.mxu0 0.0
  %1364 = vmatprep.subr.mxu0 0.0
  %1365 = vmatpush1.msra.mxu0 0.0
  %1366 = vmatprep.subr.mxu0 0.0
  %1367 = vmatpush1.msra.mxu0 %v732
  %1368 = vmatprep.subr.mxu0 0.0
  %1369 = vmatpush1.msra.mxu0 %v731
  %1370 = vmatprep.subr.mxu0 0.0
  %1371 = vmatpush1.msra.mxu0 %v730
  %1372 = vmatprep.subr.mxu0 0.0
  %1373 = vmatpush1.msra.mxu0 %v729
  %1374 = vmatprep.subr.mxu0 0.0
  %1375 = vmatpush1.msra.mxu0 %v728
  %1376 = vmatprep.subr.mxu0 0.0
  %1377 = vmatpush1.msra.mxu0 %v727
  %1378 = vmatprep.subr.mxu0 0.0
  %1379 = vmatpush1.msra.mxu0 %v726
  %1380 = vmatprep.subr.mxu0 0.0
  %1381 = vmatpush1.msra.mxu0 %v725
  %1382 = vmatprep.subr.mxu0 0.0
  %1383 = vmatpush2.msra.mxu0 0.0
  %1384 = vmatprep.subr.mxu0 0.0
  %1385 = vmatpush2.msra.mxu0 0.0
  %1386 = vmatprep.subr.mxu0 0.0
  %1387 = vmatpush2.msra.mxu0 0.0
  %1388 = vmatprep.subr.mxu0 0.0
  %1389 = vmatpush2.msra.mxu0 0.0
  %1390 = vmatprep.subr.mxu0 0.0
  %1391 = vmatpush2.msra.mxu0 0.0
  %1392 = vmatprep.subr.mxu0 0.0
  %1393 = vmatpush2.msra.mxu0 0.0
  %1394 = vmatprep.subr.mxu0 0.0
  %1395 = vmatpush2.msra.mxu0 0.0
  %1396 = vmatprep.subr.mxu0 0.0
  %1397 = vmatpush2.msra.mxu0 0.0
  %1398 = vmatprep.subr.mxu0 0.0
  %1399 = vmatpush2.msra.mxu0 0.0
  %1400 = vmatprep.subr.mxu0 0.0
  %1401 = vmatpush2.msra.mxu0 0.0
  %1402 = vmatprep.subr.mxu0 0.0
  %1403 = vmatpush2.msra.mxu0 0.0
  %1404 = vmatprep.subr.mxu0 0.0
  %1405 = vmatpush2.msra.mxu0 0.0
  %1406 = vmatprep.subr.mxu0 0.0
  %1407 = vmatpush2.msra.mxu0 0.0
  %1408 = vmatprep.subr.mxu0 0.0
  %1409 = vmatpush2.msra.mxu0 0.0
  %1410 = vmatprep.subr.mxu0 0.0
  %1411 = vmatpush2.msra.mxu0 0.0
  %1412 = vmatprep.subr.mxu0 0.0
  %1413 = vmatpush2.msra.mxu0 0.0
  %1414 = vmatprep.mubr.f32.mxu0 0.0
  %1415 = vmatmul.mubr.f32.gmra.mxu0 %v1348
  %v1416 = vpop.f32.mrf.mxu0
  %v1417 = vadd.f32 %v938, %v1416
  %v1418 = vpop.f32.mrf.mxu0
  %1419 = vdwg.mxu0
  %v1420 = vxor.u32 %v1417, 2147483648
  %v1421 = vmul.f32 %v1420, 1.442695
  %v1422 = vpow.pop %v1421
  %v1423 = vadd.f32 %v1422, 1.0
  %v1424 = vrcp.pop %v1423
  %v1425 = vmul.f32 1.0, %v1424
  %v1426 = vtanh.pop %v1417
  %v1427 = vmul.f32 %v1425, %v1234
  %1429 = vrot.lane.b32.xlu0 %v1426, 64
  %v1430 = vpop.permute.xlu0 %1429
  %v1432 = vmul.f32 %v1425, %v1430
  %1434 = vrot.lane.b32.xlu0 %v1432, 32
  %v1435 = vpop.permute.xlu0 %1434
  %v1437 = vadd.f32 %v1427, %v1435
  %v1438 = vtanh.pop %v1437
  %1440 = vrot.lane.b32.xlu0 %v1438, 64
  %v1441 = vpop.permute.xlu0 %1440
  %v1443 = vmul.f32 %v1425, %v1441
  %1445 = vrot.lane.b32.xlu0 %v1340, 32
  %v1446 = vpop.permute.xlu0 %1445
  %v1447 = vsel %vm591, %v1446, 0
  %1449 = vmatprep.subr.mxu0 0.0
  %1450 = vmatpush1.msra.mxu0 0.0
  %1451 = vmatprep.subr.mxu0 0.0
  %1452 = vmatpush1.msra.mxu0 0.0
  %1453 = vmatprep.subr.mxu0 0.0
  %1454 = vmatpush1.msra.mxu0 0.0
  %1455 = vmatprep.subr.mxu0 0.0
  %1456 = vmatpush1.msra.mxu0 0.0
  %1457 = vmatprep.subr.mxu0 0.0
  %1458 = vmatpush1.msra.mxu0 0.0
  %1459 = vmatprep.subr.mxu0 0.0
  %1460 = vmatpush1.msra.mxu0 0.0
  %1461 = vmatprep.subr.mxu0 0.0
  %1462 = vmatpush1.msra.mxu0 0.0
  %1463 = vmatprep.subr.mxu0 0.0
  %1464 = vmatpush1.msra.mxu0 0.0
  %1465 = vmatprep.subr.mxu0 0.0
  %1466 = vmatpush1.msra.mxu0 0.0
  %1467 = vmatprep.subr.mxu0 0.0
  %1468 = vmatpush1.msra.mxu0 0.0
  %1469 = vmatprep.subr.mxu0 0.0
  %1470 = vmatpush1.msra.mxu0 0.0
  %1471 = vmatprep.subr.mxu0 0.0
  %1472 = vmatpush1.msra.mxu0 0.0
  %1473 = vmatprep.subr.mxu0 0.0
  %1474 = vmatpush1.msra.mxu0 %v724
  %1475 = vmatprep.subr.mxu0 0.0
  %1476 = vmatpush1.msra.mxu0 %v723
  %1477 = vmatprep.subr.mxu0 0.0
  %1478 = vmatpush1.msra.mxu0 %v722
  %1479 = vmatprep.subr.mxu0 0.0
  %1480 = vmatpush1.msra.mxu0 %v721
  %1481 = vmatprep.subr.mxu0 0.0
  %1482 = vmatpush2.msra.mxu0 0.0
  %1483 = vmatprep.subr.mxu0 0.0
  %1484 = vmatpush2.msra.mxu0 0.0
  %1485 = vmatprep.subr.mxu0 0.0
  %1486 = vmatpush2.msra.mxu0 0.0
  %1487 = vmatprep.subr.mxu0 0.0
  %1488 = vmatpush2.msra.mxu0 0.0
  %1489 = vmatprep.subr.mxu0 0.0
  %1490 = vmatpush2.msra.mxu0 0.0
  %1491 = vmatprep.subr.mxu0 0.0
  %1492 = vmatpush2.msra.mxu0 0.0
  %1493 = vmatprep.subr.mxu0 0.0
  %1494 = vmatpush2.msra.mxu0 0.0
  %1495 = vmatprep.subr.mxu0 0.0
  %1496 = vmatpush2.msra.mxu0 0.0
  %1497 = vmatprep.subr.mxu0 0.0
  %1498 = vmatpush2.msra.mxu0 0.0
  %1499 = vmatprep.subr.mxu0 0.0
  %1500 = vmatpush2.msra.mxu0 0.0
  %1501 = vmatprep.subr.mxu0 0.0
  %1502 = vmatpush2.msra.mxu0 0.0
  %1503 = vmatprep.subr.mxu0 0.0
  %1504 = vmatpush2.msra.mxu0 0.0
  %1505 = vmatprep.subr.mxu0 0.0
  %1506 = vmatpush2.msra.mxu0 0.0
  %1507 = vmatprep.subr.mxu0 0.0
  %1508 = vmatpush2.msra.mxu0 0.0
  %1509 = vmatprep.subr.mxu0 0.0
  %1510 = vmatpush2.msra.mxu0 0.0
  %1511 = vmatprep.subr.mxu0 0.0
  %1512 = vmatpush2.msra.mxu0 0.0
  %1513 = vmatprep.mubr.f32.mxu0 0.0
  %1514 = vmatmul.mubr.f32.gmra.mxu0 %v1447
  %v1515 = vpop.f32.mrf.mxu0
  %v1516 = vadd.f32 0.0, %v1515
  %v1517 = vpop.f32.mrf.mxu0
  %1518 = vdwg.mxu0
  %v1519 = vadd.f32 %v703, %v1516
  %v1520 = vxor.u32 %v1519, 2147483648
  %v1521 = vmul.f32 %v1520, 1.442695
  %v1522 = vpow.pop %v1521
  %v1523 = vadd.f32 %v1522, 1.0
  %v1524 = vrcp.pop %v1523
  %v1525 = vmul.f32 1.0, %v1524
  %v1526 = vtanh.pop %v1519
  %v1527 = vmul.f32 %v1525, %v1334
  %1529 = vrot.lane.b32.xlu0 %v1526, 64
  %v1530 = vpop.permute.xlu0 %1529
  %v1532 = vmul.f32 %v1525, %v1530
  %1534 = vrot.lane.b32.xlu0 %v1532, 32
  %v1535 = vpop.permute.xlu0 %1534
  %v1537 = vadd.f32 %v1527, %v1535
  %v1538 = vtanh.pop %v1537
  %1540 = vrot.lane.b32.xlu0 %v1538, 64
  %v1541 = vpop.permute.xlu0 %1540
  %v1543 = vmul.f32 %v1525, %v1541
  %1546 = vrot.lane.b32.xlu0 %v1443, 64
  %v1547 = vpop.permute.xlu0 %1546
  %v1549 = vsel %vm591, %v1446, %v1547
  %v1551 = vsel %vm940, %v1549, 0
  %1553 = vmatprep.subr.mxu0 0.0
  %1554 = vmatpush1.msra.mxu0 0.0
  %1555 = vmatprep.subr.mxu0 0.0
  %1556 = vmatpush1.msra.mxu0 0.0
  %1557 = vmatprep.subr.mxu0 0.0
  %1558 = vmatpush1.msra.mxu0 0.0
  %1559 = vmatprep.subr.mxu0 0.0
  %1560 = vmatpush1.msra.mxu0 0.0
  %1561 = vmatprep.subr.mxu0 0.0
  %1562 = vmatpush1.msra.mxu0 0.0
  %1563 = vmatprep.subr.mxu0 0.0
  %1564 = vmatpush1.msra.mxu0 0.0
  %1565 = vmatprep.subr.mxu0 0.0
  %1566 = vmatpush1.msra.mxu0 0.0
  %1567 = vmatprep.subr.mxu0 0.0
  %1568 = vmatpush1.msra.mxu0 0.0
  %1569 = vmatprep.subr.mxu0 0.0
  %1570 = vmatpush1.msra.mxu0 %v732
  %1571 = vmatprep.subr.mxu0 0.0
  %1572 = vmatpush1.msra.mxu0 %v731
  %1573 = vmatprep.subr.mxu0 0.0
  %1574 = vmatpush1.msra.mxu0 %v730
  %1575 = vmatprep.subr.mxu0 0.0
  %1576 = vmatpush1.msra.mxu0 %v729
  %1577 = vmatprep.subr.mxu0 0.0
  %1578 = vmatpush1.msra.mxu0 %v728
  %1579 = vmatprep.subr.mxu0 0.0
  %1580 = vmatpush1.msra.mxu0 %v727
  %1581 = vmatprep.subr.mxu0 0.0
  %1582 = vmatpush1.msra.mxu0 %v726
  %1583 = vmatprep.subr.mxu0 0.0
  %1584 = vmatpush1.msra.mxu0 %v725
  %1585 = vmatprep.subr.mxu0 0.0
  %1586 = vmatpush2.msra.mxu0 0.0
  %1587 = vmatprep.subr.mxu0 0.0
  %1588 = vmatpush2.msra.mxu0 0.0
  %1589 = vmatprep.subr.mxu0 0.0
  %1590 = vmatpush2.msra.mxu0 0.0
  %1591 = vmatprep.subr.mxu0 0.0
  %1592 = vmatpush2.msra.mxu0 0.0
  %1593 = vmatprep.subr.mxu0 0.0
  %1594 = vmatpush2.msra.mxu0 0.0
  %1595 = vmatprep.subr.mxu0 0.0
  %1596 = vmatpush2.msra.mxu0 0.0
  %1597 = vmatprep.subr.mxu0 0.0
  %1598 = vmatpush2.msra.mxu0 0.0
  %1599 = vmatprep.subr.mxu0 0.0
  %1600 = vmatpush2.msra.mxu0 0.0
  %1601 = vmatprep.subr.mxu0 0.0
  %1602 = vmatpush2.msra.mxu0 0.0
  %1603 = vmatprep.subr.mxu0 0.0
  %1604 = vmatpush2.msra.mxu0 0.0
  %1605 = vmatprep.subr.mxu0 0.0
  %1606 = vmatpush2.msra.mxu0 0.0
  %1607 = vmatprep.subr.mxu0 0.0
  %1608 = vmatpush2.msra.mxu0 0.0
  %1609 = vmatprep.subr.mxu0 0.0
  %1610 = vmatpush2.msra.mxu0 0.0
  %1611 = vmatprep.subr.mxu0 0.0
  %1612 = vmatpush2.msra.mxu0 0.0
  %1613 = vmatprep.subr.mxu0 0.0
  %1614 = vmatpush2.msra.mxu0 0.0
  %1615 = vmatprep.subr.mxu0 0.0
  %1616 = vmatpush2.msra.mxu0 0.0
  %1617 = vmatprep.mubr.f32.mxu0 0.0
  %1618 = vmatmul.mubr.f32.gmra.mxu0 %v1551
  %v1619 = vpop.f32.mrf.mxu0
  %v1620 = vadd.f32 %v938, %v1619
  %v1621 = vpop.f32.mrf.mxu0
  %1622 = vdwg.mxu0
  %v1623 = vxor.u32 %v1620, 2147483648
  %v1624 = vmul.f32 %v1623, 1.442695
  %v1625 = vpow.pop %v1624
  %v1626 = vadd.f32 %v1625, 1.0
  %v1627 = vrcp.pop %v1626
  %v1628 = vmul.f32 1.0, %v1627
  %v1629 = vtanh.pop %v1620
  %v1630 = vmul.f32 %v1628, %v1437
  %1632 = vrot.lane.b32.xlu0 %v1629, 64
  %v1633 = vpop.permute.xlu0 %1632
  %v1635 = vmul.f32 %v1628, %v1633
  %1637 = vrot.lane.b32.xlu0 %v1635, 32
  %v1638 = vpop.permute.xlu0 %1637
  %v1640 = vadd.f32 %v1630, %v1638
  %v1641 = vtanh.pop %v1640
  %1643 = vrot.lane.b32.xlu0 %v1641, 64
  %v1644 = vpop.permute.xlu0 %1643
  %v1646 = vmul.f32 %v1628, %v1644
  %1648 = vrot.lane.b32.xlu0 %v1543, 32
  %v1649 = vpop.permute.xlu0 %1648
  %v1650 = vsel %vm591, %v1649, 0
  %1652 = vmatprep.subr.mxu0 0.0
  %1653 = vmatpush1.msra.mxu0 0.0
  %1654 = vmatprep.subr.mxu0 0.0
  %1655 = vmatpush1.msra.mxu0 0.0
  %1656 = vmatprep.subr.mxu0 0.0
  %1657 = vmatpush1.msra.mxu0 0.0
  %1658 = vmatprep.subr.mxu0 0.0
  %1659 = vmatpush1.msra.mxu0 0.0
  %1660 = vmatprep.subr.mxu0 0.0
  %1661 = vmatpush1.msra.mxu0 0.0
  %1662 = vmatprep.subr.mxu0 0.0
  %1663 = vmatpush1.msra.mxu0 0.0
  %1664 = vmatprep.subr.mxu0 0.0
  %1665 = vmatpush1.msra.mxu0 0.0
  %1666 = vmatprep.subr.mxu0 0.0
  %1667 = vmatpush1.msra.mxu0 0.0
  %1668 = vmatprep.subr.mxu0 0.0
  %1669 = vmatpush1.msra.mxu0 0.0
  %1670 = vmatprep.subr.mxu0 0.0
  %1671 = vmatpush1.msra.mxu0 0.0
  %1672 = vmatprep.subr.mxu0 0.0
  %1673 = vmatpush1.msra.mxu0 0.0
  %1674 = vmatprep.subr.mxu0 0.0
  %1675 = vmatpush1.msra.mxu0 0.0
  %1676 = vmatprep.subr.mxu0 0.0
  %1677 = vmatpush1.msra.mxu0 %v724
  %1678 = vmatprep.subr.mxu0 0.0
  %1679 = vmatpush1.msra.mxu0 %v723
  %1680 = vmatprep.subr.mxu0 0.0
  %1681 = vmatpush1.msra.mxu0 %v722
  %1682 = vmatprep.subr.mxu0 0.0
  %1683 = vmatpush1.msra.mxu0 %v721
  %1684 = vmatprep.subr.mxu0 0.0
  %1685 = vmatpush2.msra.mxu0 0.0
  %1686 = vmatprep.subr.mxu0 0.0
  %1687 = vmatpush2.msra.mxu0 0.0
  %1688 = vmatprep.subr.mxu0 0.0
  %1689 = vmatpush2.msra.mxu0 0.0
  %1690 = vmatprep.subr.mxu0 0.0
  %1691 = vmatpush2.msra.mxu0 0.0
  %1692 = vmatprep.subr.mxu0 0.0
  %1693 = vmatpush2.msra.mxu0 0.0
  %1694 = vmatprep.subr.mxu0 0.0
  %1695 = vmatpush2.msra.mxu0 0.0
  %1696 = vmatprep.subr.mxu0 0.0
  %1697 = vmatpush2.msra.mxu0 0.0
  %1698 = vmatprep.subr.mxu0 0.0
  %1699 = vmatpush2.msra.mxu0 0.0
  %1700 = vmatprep.subr.mxu0 0.0
  %1701 = vmatpush2.msra.mxu0 0.0
  %1702 = vmatprep.subr.mxu0 0.0
  %1703 = vmatpush2.msra.mxu0 0.0
  %1704 = vmatprep.subr.mxu0 0.0
  %1705 = vmatpush2.msra.mxu0 0.0
  %1706 = vmatprep.subr.mxu0 0.0
  %1707 = vmatpush2.msra.mxu0 0.0
  %1708 = vmatprep.subr.mxu0 0.0
  %1709 = vmatpush2.msra.mxu0 0.0
  %1710 = vmatprep.subr.mxu0 0.0
  %1711 = vmatpush2.msra.mxu0 0.0
  %1712 = vmatprep.subr.mxu0 0.0
  %1713 = vmatpush2.msra.mxu0 0.0
  %1714 = vmatprep.subr.mxu0 0.0
  %1715 = vmatpush2.msra.mxu0 0.0
  %1716 = vmatprep.mubr.f32.mxu0 0.0
  %1717 = vmatmul.mubr.f32.gmra.mxu0 %v1650
  %v1718 = vpop.f32.mrf.mxu0
  %v1719 = vadd.f32 0.0, %v1718
  %v1720 = vpop.f32.mrf.mxu0
  %1721 = vdwg.mxu0
  %v1722 = vadd.f32 %v708, %v1719
  %v1723 = vxor.u32 %v1722, 2147483648
  %v1724 = vmul.f32 %v1723, 1.442695
  %v1725 = vpow.pop %v1724
  %v1726 = vadd.f32 %v1725, 1.0
  %v1727 = vrcp.pop %v1726
  %v1728 = vmul.f32 1.0, %v1727
  %v1729 = vtanh.pop %v1722
  %v1730 = vmul.f32 %v1728, %v1537
  %1732 = vrot.lane.b32.xlu0 %v1729, 64
  %v1733 = vpop.permute.xlu0 %1732
  %v1735 = vmul.f32 %v1728, %v1733
  %1737 = vrot.lane.b32.xlu0 %v1735, 32
  %v1738 = vpop.permute.xlu0 %1737
  %v1740 = vadd.f32 %v1730, %v1738
  %v1741 = vtanh.pop %v1740
  %1743 = vrot.lane.b32.xlu0 %v1741, 64
  %v1744 = vpop.permute.xlu0 %1743
  %v1746 = vmul.f32 %v1728, %v1744
  %1749 = vrot.lane.b32.xlu0 %v1646, 64
  %v1750 = vpop.permute.xlu0 %1749
  %v1752 = vsel %vm591, %v1649, %v1750
  %v1754 = vsel %vm940, %v1752, 0
  %1756 = vmatprep.subr.mxu0 0.0
  %1757 = vmatpush1.msra.mxu0 0.0
  %1758 = vmatprep.subr.mxu0 0.0
  %1759 = vmatpush1.msra.mxu0 0.0
  %1760 = vmatprep.subr.mxu0 0.0
  %1761 = vmatpush1.msra.mxu0 0.0
  %1762 = vmatprep.subr.mxu0 0.0
  %1763 = vmatpush1.msra.mxu0 0.0
  %1764 = vmatprep.subr.mxu0 0.0
  %1765 = vmatpush1.msra.mxu0 0.0
  %1766 = vmatprep.subr.mxu0 0.0
  %1767 = vmatpush1.msra.mxu0 0.0
  %1768 = vmatprep.subr.mxu0 0.0
  %1769 = vmatpush1.msra.mxu0 0.0
  %1770 = vmatprep.subr.mxu0 0.0
  %1771 = vmatpush1.msra.mxu0 0.0
  %1772 = vmatprep.subr.mxu0 0.0
  %1773 = vmatpush1.msra.mxu0 %v732
  %1774 = vmatprep.subr.mxu0 0.0
  %1775 = vmatpush1.msra.mxu0 %v731
  %1776 = vmatprep.subr.mxu0 0.0
  %1777 = vmatpush1.msra.mxu0 %v730
  %1778 = vmatprep.subr.mxu0 0.0
  %1779 = vmatpush1.msra.mxu0 %v729
  %1780 = vmatprep.subr.mxu0 0.0
  %1781 = vmatpush1.msra.mxu0 %v728
  %1782 = vmatprep.subr.mxu0 0.0
  %1783 = vmatpush1.msra.mxu0 %v727
  %1784 = vmatprep.subr.mxu0 0.0
  %1785 = vmatpush1.msra.mxu0 %v726
  %1786 = vmatprep.subr.mxu0 0.0
  %1787 = vmatpush1.msra.mxu0 %v725
  %1788 = vmatprep.subr.mxu0 0.0
  %1789 = vmatpush2.msra.mxu0 0.0
  %1790 = vmatprep.subr.mxu0 0.0
  %1791 = vmatpush2.msra.mxu0 0.0
  %1792 = vmatprep.subr.mxu0 0.0
  %1793 = vmatpush2.msra.mxu0 0.0
  %1794 = vmatprep.subr.mxu0 0.0
  %1795 = vmatpush2.msra.mxu0 0.0
  %1796 = vmatprep.subr.mxu0 0.0
  %1797 = vmatpush2.msra.mxu0 0.0
  %1798 = vmatprep.subr.mxu0 0.0
  %1799 = vmatpush2.msra.mxu0 0.0
  %1800 = vmatprep.subr.mxu0 0.0
  %1801 = vmatpush2.msra.mxu0 0.0
  %1802 = vmatprep.subr.mxu0 0.0
  %1803 = vmatpush2.msra.mxu0 0.0
  %1804 = vmatprep.subr.mxu0 0.0
  %1805 = vmatpush2.msra.mxu0 0.0
  %1806 = vmatprep.subr.mxu0 0.0
  %1807 = vmatpush2.msra.mxu0 0.0
  %1808 = vmatprep.subr.mxu0 0.0
  %1809 = vmatpush2.msra.mxu0 0.0
  %1810 = vmatprep.subr.mxu0 0.0
  %1811 = vmatpush2.msra.mxu0 0.0
  %1812 = vmatprep.subr.mxu0 0.0
  %1813 = vmatpush2.msra.mxu0 0.0
  %1814 = vmatprep.subr.mxu0 0.0
  %1815 = vmatpush2.msra.mxu0 0.0
  %1816 = vmatprep.subr.mxu0 0.0
  %1817 = vmatpush2.msra.mxu0 0.0
  %1818 = vmatprep.subr.mxu0 0.0
  %1819 = vmatpush2.msra.mxu0 0.0
  %1820 = vmatprep.mubr.f32.mxu0 0.0
  %1821 = vmatmul.mubr.f32.gmra.mxu0 %v1754
  %v1822 = vpop.f32.mrf.mxu0
  %v1823 = vadd.f32 %v938, %v1822
  %v1824 = vpop.f32.mrf.mxu0
  %1825 = vdwg.mxu0
  %v1826 = vxor.u32 %v1823, 2147483648
  %v1827 = vmul.f32 %v1826, 1.442695
  %v1828 = vpow.pop %v1827
  %v1829 = vadd.f32 %v1828, 1.0
  %v1830 = vrcp.pop %v1829
  %v1831 = vmul.f32 1.0, %v1830
  %v1832 = vtanh.pop %v1823
  %v1833 = vmul.f32 %v1831, %v1640
  %1835 = vrot.lane.b32.xlu0 %v1832, 64
  %v1836 = vpop.permute.xlu0 %1835
  %v1838 = vmul.f32 %v1831, %v1836
  %1840 = vrot.lane.b32.xlu0 %v1838, 32
  %v1841 = vpop.permute.xlu0 %1840
  %v1843 = vadd.f32 %v1833, %v1841
  %v1844 = vtanh.pop %v1843
  %1846 = vrot.lane.b32.xlu0 %v1844, 64
  %v1847 = vpop.permute.xlu0 %1846
  %v1849 = vmul.f32 %v1831, %v1847
  %1851 = vrot.lane.b32.xlu0 %v1746, 32
  %v1852 = vpop.permute.xlu0 %1851
  %v1853 = vsel %vm591, %v1852, 0
  %1855 = vmatprep.subr.mxu0 0.0
  %1856 = vmatpush1.msra.mxu0 0.0
  %1857 = vmatprep.subr.mxu0 0.0
  %1858 = vmatpush1.msra.mxu0 0.0
  %1859 = vmatprep.subr.mxu0 0.0
  %1860 = vmatpush1.msra.mxu0 0.0
  %1861 = vmatprep.subr.mxu0 0.0
  %1862 = vmatpush1.msra.mxu0 0.0
  %1863 = vmatprep.subr.mxu0 0.0
  %1864 = vmatpush1.msra.mxu0 0.0
  %1865 = vmatprep.subr.mxu0 0.0
  %1866 = vmatpush1.msra.mxu0 0.0
  %1867 = vmatprep.subr.mxu0 0.0
  %1868 = vmatpush1.msra.mxu0 0.0
  %1869 = vmatprep.subr.mxu0 0.0
  %1870 = vmatpush1.msra.mxu0 0.0
  %1871 = vmatprep.subr.mxu0 0.0
  %1872 = vmatpush1.msra.mxu0 0.0
  %1873 = vmatprep.subr.mxu0 0.0
  %1874 = vmatpush1.msra.mxu0 0.0
  %1875 = vmatprep.subr.mxu0 0.0
  %1876 = vmatpush1.msra.mxu0 0.0
  %1877 = vmatprep.subr.mxu0 0.0
  %1878 = vmatpush1.msra.mxu0 0.0
  %1879 = vmatprep.subr.mxu0 0.0
  %1880 = vmatpush1.msra.mxu0 %v724
  %1881 = vmatprep.subr.mxu0 0.0
  %1882 = vmatpush1.msra.mxu0 %v723
  %1883 = vmatprep.subr.mxu0 0.0
  %1884 = vmatpush1.msra.mxu0 %v722
  %1885 = vmatprep.subr.mxu0 0.0
  %1886 = vmatpush1.msra.mxu0 %v721
  %1887 = vmatprep.subr.mxu0 0.0
  %1888 = vmatpush2.msra.mxu0 0.0
  %1889 = vmatprep.subr.mxu0 0.0
  %1890 = vmatpush2.msra.mxu0 0.0
  %1891 = vmatprep.subr.mxu0 0.0
  %1892 = vmatpush2.msra.mxu0 0.0
  %1893 = vmatprep.subr.mxu0 0.0
  %1894 = vmatpush2.msra.mxu0 0.0
  %1895 = vmatprep.subr.mxu0 0.0
  %1896 = vmatpush2.msra.mxu0 0.0
  %1897 = vmatprep.subr.mxu0 0.0
  %1898 = vmatpush2.msra.mxu0 0.0
  %1899 = vmatprep.subr.mxu0 0.0
  %1900 = vmatpush2.msra.mxu0 0.0
  %1901 = vmatprep.subr.mxu0 0.0
  %1902 = vmatpush2.msra.mxu0 0.0
  %1903 = vmatprep.subr.mxu0 0.0
  %1904 = vmatpush2.msra.mxu0 0.0
  %1905 = vmatprep.subr.mxu0 0.0
  %1906 = vmatpush2.msra.mxu0 0.0
  %1907 = vmatprep.subr.mxu0 0.0
  %1908 = vmatpush2.msra.mxu0 0.0
  %1909 = vmatprep.subr.mxu0 0.0
  %1910 = vmatpush2.msra.mxu0 0.0
  %1911 = vmatprep.subr.mxu0 0.0
  %1912 = vmatpush2.msra.mxu0 0.0
  %1913 = vmatprep.subr.mxu0 0.0
  %1914 = vmatpush2.msra.mxu0 0.0
  %1915 = vmatprep.subr.mxu0 0.0
  %1916 = vmatpush2.msra.mxu0 0.0
  %1917 = vmatprep.subr.mxu0 0.0
  %1918 = vmatpush2.msra.mxu0 0.0
  %1919 = vmatprep.mubr.f32.mxu0 0.0
  %1920 = vmatmul.mubr.f32.gmra.mxu0 %v1853
  %v1921 = vpop.f32.mrf.mxu0
  %v1922 = vadd.f32 0.0, %v1921
  %v1923 = vpop.f32.mrf.mxu0
  %1924 = vdwg.mxu0
  %v1925 = vadd.f32 %v713, %v1922
  %v1926 = vxor.u32 %v1925, 2147483648
  %v1927 = vmul.f32 %v1926, 1.442695
  %v1928 = vpow.pop %v1927
  %v1929 = vadd.f32 %v1928, 1.0
  %v1930 = vrcp.pop %v1929
  %v1931 = vmul.f32 1.0, %v1930
  %v1932 = vtanh.pop %v1925
  %v1933 = vmul.f32 %v1931, %v1740
  %1935 = vrot.lane.b32.xlu0 %v1932, 64
  %v1936 = vpop.permute.xlu0 %1935
  %v1938 = vmul.f32 %v1931, %v1936
  %1940 = vrot.lane.b32.xlu0 %v1938, 32
  %v1941 = vpop.permute.xlu0 %1940
  %v1943 = vadd.f32 %v1933, %v1941
  %v1944 = vtanh.pop %v1943
  %1946 = vrot.lane.b32.xlu0 %v1944, 64
  %v1947 = vpop.permute.xlu0 %1946
  %v1949 = vmul.f32 %v1931, %v1947
  %1952 = vrot.lane.b32.xlu0 %v1849, 64
  %v1953 = vpop.permute.xlu0 %1952
  %v1955 = vsel %vm591, %v1852, %v1953
  %v1957 = vsel %vm940, %v1955, 0
  %1959 = vmatprep.subr.mxu0 0.0
  %1960 = vmatpush1.msra.mxu0 0.0
  %1961 = vmatprep.subr.mxu0 0.0
  %1962 = vmatpush1.msra.mxu0 0.0
  %1963 = vmatprep.subr.mxu0 0.0
  %1964 = vmatpush1.msra.mxu0 0.0
  %1965 = vmatprep.subr.mxu0 0.0
  %1966 = vmatpush1.msra.mxu0 0.0
  %1967 = vmatprep.subr.mxu0 0.0
  %1968 = vmatpush1.msra.mxu0 0.0
  %1969 = vmatprep.subr.mxu0 0.0
  %1970 = vmatpush1.msra.mxu0 0.0
  %1971 = vmatprep.subr.mxu0 0.0
  %1972 = vmatpush1.msra.mxu0 0.0
  %1973 = vmatprep.subr.mxu0 0.0
  %1974 = vmatpush1.msra.mxu0 0.0
  %1975 = vmatprep.subr.mxu0 0.0
  %1976 = vmatpush1.msra.mxu0 %v732
  %1977 = vmatprep.subr.mxu0 0.0
  %1978 = vmatpush1.msra.mxu0 %v731
  %1979 = vmatprep.subr.mxu0 0.0
  %1980 = vmatpush1.msra.mxu0 %v730
  %1981 = vmatprep.subr.mxu0 0.0
  %1982 = vmatpush1.msra.mxu0 %v729
  %1983 = vmatprep.subr.mxu0 0.0
  %1984 = vmatpush1.msra.mxu0 %v728
  %1985 = vmatprep.subr.mxu0 0.0
  %1986 = vmatpush1.msra.mxu0 %v727
  %1987 = vmatprep.subr.mxu0 0.0
  %1988 = vmatpush1.msra.mxu0 %v726
  %1989 = vmatprep.subr.mxu0 0.0
  %1990 = vmatpush1.msra.mxu0 %v725
  %1991 = vmatprep.subr.mxu0 0.0
  %1992 = vmatpush2.msra.mxu0 0.0
  %1993 = vmatprep.subr.mxu0 0.0
  %1994 = vmatpush2.msra.mxu0 0.0
  %1995 = vmatprep.subr.mxu0 0.0
  %1996 = vmatpush2.msra.mxu0 0.0
  %1997 = vmatprep.subr.mxu0 0.0
  %1998 = vmatpush2.msra.mxu0 0.0
  %1999 = vmatprep.subr.mxu0 0.0
  %2000 = vmatpush2.msra.mxu0 0.0
  %2001 = vmatprep.subr.mxu0 0.0
  %2002 = vmatpush2.msra.mxu0 0.0
  %2003 = vmatprep.subr.mxu0 0.0
  %2004 = vmatpush2.msra.mxu0 0.0
  %2005 = vmatprep.subr.mxu0 0.0
  %2006 = vmatpush2.msra.mxu0 0.0
  %2007 = vmatprep.subr.mxu0 0.0
  %2008 = vmatpush2.msra.mxu0 0.0
  %2009 = vmatprep.subr.mxu0 0.0
  %2010 = vmatpush2.msra.mxu0 0.0
  %2011 = vmatprep.subr.mxu0 0.0
  %2012 = vmatpush2.msra.mxu0 0.0
  %2013 = vmatprep.subr.mxu0 0.0
  %2014 = vmatpush2.msra.mxu0 0.0
  %2015 = vmatprep.subr.mxu0 0.0
  %2016 = vmatpush2.msra.mxu0 0.0
  %2017 = vmatprep.subr.mxu0 0.0
  %2018 = vmatpush2.msra.mxu0 0.0
  %2019 = vmatprep.subr.mxu0 0.0
  %2020 = vmatpush2.msra.mxu0 0.0
  %2021 = vmatprep.subr.mxu0 0.0
  %2022 = vmatpush2.msra.mxu0 0.0
  %2023 = vmatprep.mubr.f32.mxu0 0.0
  %2024 = vmatmul.mubr.f32.gmra.mxu0 %v1957
  %v2025 = vpop.f32.mrf.mxu0
  %v2026 = vadd.f32 %v938, %v2025
  %v2027 = vpop.f32.mrf.mxu0
  %2028 = vdwg.mxu0
  %v2029 = vxor.u32 %v2026, 2147483648
  %v2030 = vmul.f32 %v2029, 1.442695
  %v2031 = vpow.pop %v2030
  %v2032 = vadd.f32 %v2031, 1.0
  %v2033 = vrcp.pop %v2032
  %v2034 = vmul.f32 1.0, %v2033
  %v2035 = vtanh.pop %v2026
  %v2036 = vmul.f32 %v2034, %v1843
  %2038 = vrot.lane.b32.xlu0 %v2035, 64
  %v2039 = vpop.permute.xlu0 %2038
  %v2041 = vmul.f32 %v2034, %v2039
  %2043 = vrot.lane.b32.xlu0 %v2041, 32
  %v2044 = vpop.permute.xlu0 %2043
  %v2046 = vadd.f32 %v2036, %v2044
  %v2047 = vtanh.pop %v2046
  %2049 = vrot.lane.b32.xlu0 %v2047, 64
  %v2050 = vpop.permute.xlu0 %2049
  %v2052 = vmul.f32 %v2034, %v2050
  %2054 = vrot.lane.b32.xlu0 %v1949, 32
  %v2055 = vpop.permute.xlu0 %2054
  %v2056 = vsel %vm591, %v2055, 0
  %2058 = vmatprep.subr.mxu0 0.0
  %2059 = vmatpush1.msra.mxu0 0.0
  %2060 = vmatprep.subr.mxu0 0.0
  %2061 = vmatpush1.msra.mxu0 0.0
  %2062 = vmatprep.subr.mxu0 0.0
  %2063 = vmatpush1.msra.mxu0 0.0
  %2064 = vmatprep.subr.mxu0 0.0
  %2065 = vmatpush1.msra.mxu0 0.0
  %2066 = vmatprep.subr.mxu0 0.0
  %2067 = vmatpush1.msra.mxu0 0.0
  %2068 = vmatprep.subr.mxu0 0.0
  %2069 = vmatpush1.msra.mxu0 0.0
  %2070 = vmatprep.subr.mxu0 0.0
  %2071 = vmatpush1.msra.mxu0 0.0
  %2072 = vmatprep.subr.mxu0 0.0
  %2073 = vmatpush1.msra.mxu0 0.0
  %2074 = vmatprep.subr.mxu0 0.0
  %2075 = vmatpush1.msra.mxu0 0.0
  %2076 = vmatprep.subr.mxu0 0.0
  %2077 = vmatpush1.msra.mxu0 0.0
  %2078 = vmatprep.subr.mxu0 0.0
  %2079 = vmatpush1.msra.mxu0 0.0
  %2080 = vmatprep.subr.mxu0 0.0
  %2081 = vmatpush1.msra.mxu0 0.0
  %2082 = vmatprep.subr.mxu0 0.0
  %2083 = vmatpush1.msra.mxu0 %v724
  %2084 = vmatprep.subr.mxu0 0.0
  %2085 = vmatpush1.msra.mxu0 %v723
  %2086 = vmatprep.subr.mxu0 0.0
  %2087 = vmatpush1.msra.mxu0 %v722
  %2088 = vmatprep.subr.mxu0 0.0
  %2089 = vmatpush1.msra.mxu0 %v721
  %2090 = vmatprep.subr.mxu0 0.0
  %2091 = vmatpush2.msra.mxu0 0.0
  %2092 = vmatprep.subr.mxu0 0.0
  %2093 = vmatpush2.msra.mxu0 0.0
  %2094 = vmatprep.subr.mxu0 0.0
  %2095 = vmatpush2.msra.mxu0 0.0
  %2096 = vmatprep.subr.mxu0 0.0
  %2097 = vmatpush2.msra.mxu0 0.0
  %2098 = vmatprep.subr.mxu0 0.0
  %2099 = vmatpush2.msra.mxu0 0.0
  %2100 = vmatprep.subr.mxu0 0.0
  %2101 = vmatpush2.msra.mxu0 0.0
  %2102 = vmatprep.subr.mxu0 0.0
  %2103 = vmatpush2.msra.mxu0 0.0
  %2104 = vmatprep.subr.mxu0 0.0
  %2105 = vmatpush2.msra.mxu0 0.0
  %2106 = vmatprep.subr.mxu0 0.0
  %2107 = vmatpush2.msra.mxu0 0.0
  %2108 = vmatprep.subr.mxu0 0.0
  %2109 = vmatpush2.msra.mxu0 0.0
  %2110 = vmatprep.subr.mxu0 0.0
  %2111 = vmatpush2.msra.mxu0 0.0
  %2112 = vmatprep.subr.mxu0 0.0
  %2113 = vmatpush2.msra.mxu0 0.0
  %2114 = vmatprep.subr.mxu0 0.0
  %2115 = vmatpush2.msra.mxu0 0.0
  %2116 = vmatprep.subr.mxu0 0.0
  %2117 = vmatpush2.msra.mxu0 0.0
  %2118 = vmatprep.subr.mxu0 0.0
  %2119 = vmatpush2.msra.mxu0 0.0
  %2120 = vmatprep.subr.mxu0 0.0
  %2121 = vmatpush2.msra.mxu0 0.0
  %2122 = vmatprep.mubr.f32.mxu0 0.0
  %2123 = vmatmul.mubr.f32.gmra.mxu0 %v2056
  %v2124 = vpop.f32.mrf.mxu0
  %v2125 = vadd.f32 0.0, %v2124
  %v2126 = vpop.f32.mrf.mxu0
  %2127 = vdwg.mxu0
  %v2128 = vadd.f32 %v718, %v2125
  %v2129 = vxor.u32 %v2128, 2147483648
  %v2130 = vmul.f32 %v2129, 1.442695
  %v2131 = vpow.pop %v2130
  %v2132 = vadd.f32 %v2131, 1.0
  %v2133 = vrcp.pop %v2132
  %v2134 = vmul.f32 1.0, %v2133
  %v2135 = vtanh.pop %v2128
  %v2136 = vmul.f32 %v2134, %v1943
  %2138 = vrot.lane.b32.xlu0 %v2135, 64
  %v2139 = vpop.permute.xlu0 %2138
  %v2141 = vmul.f32 %v2134, %v2139
  %2143 = vrot.lane.b32.xlu0 %v2141, 32
  %v2144 = vpop.permute.xlu0 %2143
  %v2146 = vadd.f32 %v2136, %v2144
  %v2147 = vtanh.pop %v2146
  %2149 = vrot.lane.b32.xlu0 %v2147, 64
  %v2150 = vpop.permute.xlu0 %2149
  %v2152 = vmul.f32 %v2134, %v2150
  %2155 = vrot.lane.b32.xlu0 %v2052, 64
  %v2156 = vpop.permute.xlu0 %2155
  %v2158 = vsel %vm591, %v2055, %v2156
  %v2160 = vsel %vm940, %v2158, 0
  %2162 = vmatprep.subr.mxu0 0.0
  %2163 = vmatpush1.msra.mxu0 0.0
  %2164 = vmatprep.subr.mxu0 0.0
  %2165 = vmatpush1.msra.mxu0 0.0
  %2166 = vmatprep.subr.mxu0 0.0
  %2167 = vmatpush1.msra.mxu0 0.0
  %2168 = vmatprep.subr.mxu0 0.0
  %2169 = vmatpush1.msra.mxu0 0.0
  %2170 = vmatprep.subr.mxu0 0.0
  %2171 = vmatpush1.msra.mxu0 0.0
  %2172 = vmatprep.subr.mxu0 0.0
  %2173 = vmatpush1.msra.mxu0 0.0
  %2174 = vmatprep.subr.mxu0 0.0
  %2175 = vmatpush1.msra.mxu0 0.0
  %2176 = vmatprep.subr.mxu0 0.0
  %2177 = vmatpush1.msra.mxu0 0.0
  %2178 = vmatprep.subr.mxu0 0.0
  %2179 = vmatpush1.msra.mxu0 %v732
  %2180 = vmatprep.subr.mxu0 0.0
  %2181 = vmatpush1.msra.mxu0 %v731
  %2182 = vmatprep.subr.mxu0 0.0
  %2183 = vmatpush1.msra.mxu0 %v730
  %2184 = vmatprep.subr.mxu0 0.0
  %2185 = vmatpush1.msra.mxu0 %v729
  %2186 = vmatprep.subr.mxu0 0.0
  %2187 = vmatpush1.msra.mxu0 %v728
  %2188 = vmatprep.subr.mxu0 0.0
  %2189 = vmatpush1.msra.mxu0 %v727
  %2190 = vmatprep.subr.mxu0 0.0
  %2191 = vmatpush1.msra.mxu0 %v726
  %2192 = vmatprep.subr.mxu0 0.0
  %2193 = vmatpush1.msra.mxu0 %v725
  %2194 = vmatprep.subr.mxu0 0.0
  %2195 = vmatpush2.msra.mxu0 0.0
  %2196 = vmatprep.subr.mxu0 0.0
  %2197 = vmatpush2.msra.mxu0 0.0
  %2198 = vmatprep.subr.mxu0 0.0
  %2199 = vmatpush2.msra.mxu0 0.0
  %2200 = vmatprep.subr.mxu0 0.0
  %2201 = vmatpush2.msra.mxu0 0.0
  %2202 = vmatprep.subr.mxu0 0.0
  %2203 = vmatpush2.msra.mxu0 0.0
  %2204 = vmatprep.subr.mxu0 0.0
  %2205 = vmatpush2.msra.mxu0 0.0
  %2206 = vmatprep.subr.mxu0 0.0
  %2207 = vmatpush2.msra.mxu0 0.0
  %2208 = vmatprep.subr.mxu0 0.0
  %2209 = vmatpush2.msra.mxu0 0.0
  %2210 = vmatprep.subr.mxu0 0.0
  %2211 = vmatpush2.msra.mxu0 0.0
  %2212 = vmatprep.subr.mxu0 0.0
  %2213 = vmatpush2.msra.mxu0 0.0
  %2214 = vmatprep.subr.mxu0 0.0
  %2215 = vmatpush2.msra.mxu0 0.0
  %2216 = vmatprep.subr.mxu0 0.0
  %2217 = vmatpush2.msra.mxu0 0.0
  %2218 = vmatprep.subr.mxu0 0.0
  %2219 = vmatpush2.msra.mxu0 0.0
  %2220 = vmatprep.subr.mxu0 0.0
  %2221 = vmatpush2.msra.mxu0 0.0
  %2222 = vmatprep.subr.mxu0 0.0
  %2223 = vmatpush2.msra.mxu0 0.0
  %2224 = vmatprep.subr.mxu0 0.0
  %2225 = vmatpush2.msra.mxu0 0.0
  %2226 = vmatprep.mubr.f32.mxu0 0.0
  %2227 = vmatmul.mubr.f32.gmra.mxu0 %v2160
  %v2228 = vpop.f32.mrf.mxu0
  %v2229 = vadd.f32 %v938, %v2228
  %v2230 = vpop.f32.mrf.mxu0
  %2231 = vdwg.mxu0
  %v2232 = vxor.u32 %v2229, 2147483648
  %v2233 = vmul.f32 %v2232, 1.442695
  %v2234 = vpow.pop %v2233
  %v2235 = vadd.f32 %v2234, 1.0
  %v2236 = vrcp.pop %v2235
  %v2237 = vmul.f32 1.0, %v2236
  %v2238 = vtanh.pop %v2229
  %v2239 = vmul.f32 %v2237, %v2046
  %2241 = vrot.lane.b32.xlu0 %v2238, 64
  %v2242 = vpop.permute.xlu0 %2241
  %v2244 = vmul.f32 %v2237, %v2242
  %2246 = vrot.lane.b32.xlu0 %v2244, 32
  %v2247 = vpop.permute.xlu0 %2246
  %v2249 = vadd.f32 %v2239, %v2247
  %v2250 = vtanh.pop %v2249
  %2252 = vrot.lane.b32.xlu0 %v2250, 64
  %v2253 = vpop.permute.xlu0 %2252
  %v2255 = vmul.f32 %v2237, %v2253
  %2257 = vrot.lane.b32.xlu0 %v2152, 32
  %v2258 = vpop.permute.xlu0 %2257
  %2261 = vrot.lane.b32.xlu0 %v2255, 64
  %v2262 = vpop.permute.xlu0 %2261
  %v2264 = vsel %vm591, %v2258, %v2262
  %v2266 = vsel %vm940, %v2264, 0
  %2268 = vmatprep.subr.mxu0 0.0
  %2269 = vmatpush1.msra.mxu0 0.0
  %2270 = vmatprep.subr.mxu0 0.0
  %2271 = vmatpush1.msra.mxu0 0.0
  %2272 = vmatprep.subr.mxu0 0.0
  %2273 = vmatpush1.msra.mxu0 0.0
  %2274 = vmatprep.subr.mxu0 0.0
  %2275 = vmatpush1.msra.mxu0 0.0
  %2276 = vmatprep.subr.mxu0 0.0
  %2277 = vmatpush1.msra.mxu0 0.0
  %2278 = vmatprep.subr.mxu0 0.0
  %2279 = vmatpush1.msra.mxu0 0.0
  %2280 = vmatprep.subr.mxu0 0.0
  %2281 = vmatpush1.msra.mxu0 0.0
  %2282 = vmatprep.subr.mxu0 0.0
  %2283 = vmatpush1.msra.mxu0 0.0
  %2284 = vmatprep.subr.mxu0 0.0
  %2285 = vmatpush1.msra.mxu0 %v732
  %2286 = vmatprep.subr.mxu0 0.0
  %2287 = vmatpush1.msra.mxu0 %v731
  %2288 = vmatprep.subr.mxu0 0.0
  %2289 = vmatpush1.msra.mxu0 %v730
  %2290 = vmatprep.subr.mxu0 0.0
  %2291 = vmatpush1.msra.mxu0 %v729
  %2292 = vmatprep.subr.mxu0 0.0
  %2293 = vmatpush1.msra.mxu0 %v728
  %2294 = vmatprep.subr.mxu0 0.0
  %2295 = vmatpush1.msra.mxu0 %v727
  %2296 = vmatprep.subr.mxu0 0.0
  %2297 = vmatpush1.msra.mxu0 %v726
  %2298 = vmatprep.subr.mxu0 0.0
  %2299 = vmatpush1.msra.mxu0 %v725
  %2300 = vmatprep.subr.mxu0 0.0
  %2301 = vmatpush2.msra.mxu0 0.0
  %2302 = vmatprep.subr.mxu0 0.0
  %2303 = vmatpush2.msra.mxu0 0.0
  %2304 = vmatprep.subr.mxu0 0.0
  %2305 = vmatpush2.msra.mxu0 0.0
  %2306 = vmatprep.subr.mxu0 0.0
  %2307 = vmatpush2.msra.mxu0 0.0
  %2308 = vmatprep.subr.mxu0 0.0
  %2309 = vmatpush2.msra.mxu0 0.0
  %2310 = vmatprep.subr.mxu0 0.0
  %2311 = vmatpush2.msra.mxu0 0.0
  %2312 = vmatprep.subr.mxu0 0.0
  %2313 = vmatpush2.msra.mxu0 0.0
  %2314 = vmatprep.subr.mxu0 0.0
  %2315 = vmatpush2.msra.mxu0 0.0
  %2316 = vmatprep.subr.mxu0 0.0
  %2317 = vmatpush2.msra.mxu0 0.0
  %2318 = vmatprep.subr.mxu0 0.0
  %2319 = vmatpush2.msra.mxu0 0.0
  %2320 = vmatprep.subr.mxu0 0.0
  %2321 = vmatpush2.msra.mxu0 0.0
  %2322 = vmatprep.subr.mxu0 0.0
  %2323 = vmatpush2.msra.mxu0 0.0
  %2324 = vmatprep.subr.mxu0 0.0
  %2325 = vmatpush2.msra.mxu0 0.0
  %2326 = vmatprep.subr.mxu0 0.0
  %2327 = vmatpush2.msra.mxu0 0.0
  %2328 = vmatprep.subr.mxu0 0.0
  %2329 = vmatpush2.msra.mxu0 0.0
  %2330 = vmatprep.subr.mxu0 0.0
  %2331 = vmatpush2.msra.mxu0 0.0
  %2332 = vmatprep.mubr.f32.mxu0 0.0
  %2333 = vmatmul.mubr.f32.gmra.mxu0 %v2266
  %v2334 = vpop.f32.mrf.mxu0
  %v2335 = vadd.f32 %v938, %v2334
  %v2336 = vpop.f32.mrf.mxu0
  %2337 = vdwg.mxu0
  %v2338 = vxor.u32 %v2335, 2147483648
  %v2339 = vmul.f32 %v2338, 1.442695
  %v2340 = vpow.pop %v2339
  %v2341 = vadd.f32 %v2340, 1.0
  %v2342 = vrcp.pop %v2341
  %v2343 = vmul.f32 1.0, %v2342
  %v2344 = vtanh.pop %v2335
  %v2345 = vmul.f32 %v2343, %v2249
  %2347 = vrot.lane.b32.xlu0 %v2344, 64
  %v2348 = vpop.permute.xlu0 %2347
  %v2350 = vmul.f32 %v2343, %v2348
  %2352 = vrot.lane.b32.xlu0 %v2350, 32
  %v2353 = vpop.permute.xlu0 %2352
  %v2355 = vadd.f32 %v2345, %v2353
  %v2356 = vtanh.pop %v2355
  %2358 = vrot.lane.b32.xlu0 %v2356, 64
  %v2359 = vpop.permute.xlu0 %2358
  %v2361 = vmul.f32 %v2343, %v2359
  %v2362 = vld [vmem:[%s8] sm:$0xff]
  %v2363 = vld [vmem:[%s8 + $0x8] sm:$0xff]
  %v2364 = vld [vmem:[%s8 + $0x10] sm:$0xff]
  %v2365 = vld [vmem:[%s8 + $0x18] sm:$0xff]
  %v2366 = vld [vmem:[%s9] sm:$0x1]
  %v2368 = vlaneseq
  %v2369 = vshrl.u32 %v2368, 7
  %v2370 = vsub.s32 0, %v2369
  %v2371 = vrot.slane %v2366, %v2370
  %2374 = vrot.lane.b32.xlu0 %v2361, 32
  %v2375 = vpop.permute.xlu0 %2374
  %v2376 = vsel %vm591, %v2375, 0
  %2378 = vmatprep.subr.mxu0 0.0
  %2379 = vmatpush1.msra.mxu0 0.0
  %2380 = vmatprep.subr.mxu0 0.0
  %2381 = vmatpush1.msra.mxu0 0.0
  %2382 = vmatprep.subr.mxu0 0.0
  %2383 = vmatpush1.msra.mxu0 0.0
  %2384 = vmatprep.subr.mxu0 0.0
  %2385 = vmatpush1.msra.mxu0 0.0
  %2386 = vmatprep.subr.mxu0 0.0
  %2387 = vmatpush1.msra.mxu0 0.0
  %2388 = vmatprep.subr.mxu0 0.0
  %2389 = vmatpush1.msra.mxu0 0.0
  %2390 = vmatprep.subr.mxu0 0.0
  %2391 = vmatpush1.msra.mxu0 0.0
  %2392 = vmatprep.subr.mxu0 0.0
  %2393 = vmatpush1.msra.mxu0 0.0
  %2394 = vmatprep.subr.mxu0 0.0
  %2395 = vmatpush1.msra.mxu0 0.0
  %2396 = vmatprep.subr.mxu0 0.0
  %2397 = vmatpush1.msra.mxu0 0.0
  %2398 = vmatprep.subr.mxu0 0.0
  %2399 = vmatpush1.msra.mxu0 0.0
  %2400 = vmatprep.subr.mxu0 0.0
  %2401 = vmatpush1.msra.mxu0 0.0
  %2402 = vmatprep.subr.mxu0 0.0
  %2403 = vmatpush1.msra.mxu0 %v2365
  %2404 = vmatprep.subr.mxu0 0.0
  %2405 = vmatpush1.msra.mxu0 %v2364
  %2406 = vmatprep.subr.mxu0 0.0
  %2407 = vmatpush1.msra.mxu0 %v2363
  %2408 = vmatprep.subr.mxu0 0.0
  %2409 = vmatpush1.msra.mxu0 %v2362
  %2410 = vmatprep.subr.mxu0 0.0
  %2411 = vmatpush2.msra.mxu0 0.0
  %2412 = vmatprep.subr.mxu0 0.0
  %2413 = vmatpush2.msra.mxu0 0.0
  %2414 = vmatprep.subr.mxu0 0.0
  %2415 = vmatpush2.msra.mxu0 0.0
  %2416 = vmatprep.subr.mxu0 0.0
  %2417 = vmatpush2.msra.mxu0 0.0
  %2418 = vmatprep.subr.mxu0 0.0
  %2419 = vmatpush2.msra.mxu0 0.0
  %2420 = vmatprep.subr.mxu0 0.0
  %2421 = vmatpush2.msra.mxu0 0.0
  %2422 = vmatprep.subr.mxu0 0.0
  %2423 = vmatpush2.msra.mxu0 0.0
  %2424 = vmatprep.subr.mxu0 0.0
  %2425 = vmatpush2.msra.mxu0 0.0
  %2426 = vmatprep.subr.mxu0 0.0
  %2427 = vmatpush2.msra.mxu0 0.0
  %2428 = vmatprep.subr.mxu0 0.0
  %2429 = vmatpush2.msra.mxu0 0.0
  %2430 = vmatprep.subr.mxu0 0.0
  %2431 = vmatpush2.msra.mxu0 0.0
  %2432 = vmatprep.subr.mxu0 0.0
  %2433 = vmatpush2.msra.mxu0 0.0
  %2434 = vmatprep.subr.mxu0 0.0
  %2435 = vmatpush2.msra.mxu0 0.0
  %2436 = vmatprep.subr.mxu0 0.0
  %2437 = vmatpush2.msra.mxu0 0.0
  %2438 = vmatprep.subr.mxu0 0.0
  %2439 = vmatpush2.msra.mxu0 0.0
  %2440 = vmatprep.subr.mxu0 0.0
  %2441 = vmatpush2.msra.mxu0 0.0
  %2442 = vmatprep.mubr.f32.mxu0 0.0
  %2443 = vmatmul.mubr.f32.gmra.mxu0 %v2376
  %v2444 = vpop.f32.mrf.mxu0
  %v2445 = vadd.f32 %v2371, %v2444
  %v2446 = vpop.f32.mrf.mxu0
  %2447 = vdwg.mxu0
  %v2448 = vmax.f32 %v2445, 0.0
  %v2449 = vld [vmem:[%s10] sm:$0xff]
  %v2450 = vld [vmem:[%s10 + $0x8] sm:$0xff]
  %v2451 = vld [vmem:[%s10 + $0x10] sm:$0xff]
  %v2452 = vld [vmem:[%s10 + $0x18] sm:$0xff]
  %v2453 = vld [vmem:[%s11] sm:$0x1]
  %v2455 = vlaneseq
  %v2456 = vshrl.u32 %v2455, 7
  %v2457 = vsub.s32 0, %v2456
  %v2458 = vrot.slane %v2453, %v2457
  %v2461 = vsel %vm591, %v2448, 0
  %2463 = vmatprep.subr.mxu0 0.0
  %2464 = vmatpush1.msra.mxu0 0.0
  %2465 = vmatprep.subr.mxu0 0.0
  %2466 = vmatpush1.msra.mxu0 0.0
  %2467 = vmatprep.subr.mxu0 0.0
  %2468 = vmatpush1.msra.mxu0 0.0
  %2469 = vmatprep.subr.mxu0 0.0
  %2470 = vmatpush1.msra.mxu0 0.0
  %2471 = vmatprep.subr.mxu0 0.0
  %2472 = vmatpush1.msra.mxu0 0.0
  %2473 = vmatprep.subr.mxu0 0.0
  %2474 = vmatpush1.msra.mxu0 0.0
  %2475 = vmatprep.subr.mxu0 0.0
  %2476 = vmatpush1.msra.mxu0 0.0
  %2477 = vmatprep.subr.mxu0 0.0
  %2478 = vmatpush1.msra.mxu0 0.0
  %2479 = vmatprep.subr.mxu0 0.0
  %2480 = vmatpush1.msra.mxu0 0.0
  %2481 = vmatprep.subr.mxu0 0.0
  %2482 = vmatpush1.msra.mxu0 0.0
  %2483 = vmatprep.subr.mxu0 0.0
  %2484 = vmatpush1.msra.mxu0 0.0
  %2485 = vmatprep.subr.mxu0 0.0
  %2486 = vmatpush1.msra.mxu0 0.0
  %2487 = vmatprep.subr.mxu0 0.0
  %2488 = vmatpush1.msra.mxu0 %v2452
  %2489 = vmatprep.subr.mxu0 0.0
  %2490 = vmatpush1.msra.mxu0 %v2451
  %2491 = vmatprep.subr.mxu0 0.0
  %2492 = vmatpush1.msra.mxu0 %v2450
  %2493 = vmatprep.subr.mxu0 0.0
  %2494 = vmatpush1.msra.mxu0 %v2449
  %2495 = vmatprep.subr.mxu0 0.0
  %2496 = vmatpush2.msra.mxu0 0.0
  %2497 = vmatprep.subr.mxu0 0.0
  %2498 = vmatpush2.msra.mxu0 0.0
  %2499 = vmatprep.subr.mxu0 0.0
  %2500 = vmatpush2.msra.mxu0 0.0
  %2501 = vmatprep.subr.mxu0 0.0
  %2502 = vmatpush2.msra.mxu0 0.0
  %2503 = vmatprep.subr.mxu0 0.0
  %2504 = vmatpush2.msra.mxu0 0.0
  %2505 = vmatprep.subr.mxu0 0.0
  %2506 = vmatpush2.msra.mxu0 0.0
  %2507 = vmatprep.subr.mxu0 0.0
  %2508 = vmatpush2.msra.mxu0 0.0
  %2509 = vmatprep.subr.mxu0 0.0
  %2510 = vmatpush2.msra.mxu0 0.0
  %2511 = vmatprep.subr.mxu0 0.0
  %2512 = vmatpush2.msra.mxu0 0.0
  %2513 = vmatprep.subr.mxu0 0.0
  %2514 = vmatpush2.msra.mxu0 0.0
  %2515 = vmatprep.subr.mxu0 0.0
  %2516 = vmatpush2.msra.mxu0 0.0
  %2517 = vmatprep.subr.mxu0 0.0
  %2518 = vmatpush2.msra.mxu0 0.0
  %2519 = vmatprep.subr.mxu0 0.0
  %2520 = vmatpush2.msra.mxu0 0.0
  %2521 = vmatprep.subr.mxu0 0.0
  %2522 = vmatpush2.msra.mxu0 0.0
  %2523 = vmatprep.subr.mxu0 0.0
  %2524 = vmatpush2.msra.mxu0 0.0
  %2525 = vmatprep.subr.mxu0 0.0
  %2526 = vmatpush2.msra.mxu0 0.0
  %2527 = vmatprep.mubr.f32.mxu0 0.0
  %2528 = vmatmul.mubr.f32.gmra.mxu0 %v2461
  %v2529 = vpop.f32.mrf.mxu0
  %v2530 = vadd.f32 %v2458, %v2529
  %v2531 = vpop.f32.mrf.mxu0
  %2532 = vdwg.mxu0
  %2533 = vst [vmem:[%s12] sm:$0xff] %v2530
  // Predicated region
  $region50: #{enhanced_quantum_lstm_forward.3} parent=0 // pred_check
    _
  $region51: #{enhanced_quantum_lstm_forward.3} parent=0 // pred_check_branch
    %2535 = sbr.rel (0) target = $region53
  $region52: #{enhanced_quantum_lstm_forward.3} parent=0 // pred_region
    _
  $region53: #{enhanced_quantum_lstm_forward.3} parent=0 // pred_fallthru
    _
  // Predicated region
  $region54: #{enhanced_quantum_lstm_forward.3} parent=0 // pred_check
    _
  $region55: #{enhanced_quantum_lstm_forward.3} parent=0 // pred_check_branch
    %2537 = sbr.rel (0) target = $region57
  $region56: #{enhanced_quantum_lstm_forward.3} parent=0 // pred_region
    _
  $region57: #{enhanced_quantum_lstm_forward.3} parent=0 // pred_fallthru
    _

</llo_original>
